<compile_context>
chip_gen: v7x
topology: tpu7x:2x2x1
jax: 0.10.0
libtpu: 0.0.40
codegen_flags: <defaults>
</compile_context>

<pallas_src>
import jax
import jax.numpy as jnp
import numpy as np
from jax.experimental import pallas as pl
from jax.experimental.pallas import tpu as pltpu


def _bilinear_attention_kernel(img_ref, text_ref,
                               w_img_ref, b_img_ref,
                               w_text_ref, b_text_ref,
                               w_out_ref, b_out_ref,
                               o_ref):
    img = img_ref[...]
    text = text_ref[...]

    # img_net: Linear -> Tanh     (MXU matmul, EUP tanh, VPU bias add)
    img_feat = jnp.tanh(
        jnp.dot(img, w_img_ref[...], preferred_element_type=jnp.float32)
        + b_img_ref[...])

    # text_net: Dropout(0.2) -> Linear -> Tanh.  Dropout is identity in eval.
    # TODO(synk): train-mode dropout (random mask / scaling) not implemented.
    text_feat = jnp.tanh(
        jnp.dot(text, w_text_ref[...], preferred_element_type=jnp.float32)
        + b_text_ref[...])

    hadamard = img_feat * text_feat

    # output_net + numerically-stable row softmax.
    logits = (jnp.dot(hadamard, w_out_ref[...],
                      preferred_element_type=jnp.float32)
              + b_out_ref[...])
    logits = logits - jnp.max(logits, axis=-1, keepdims=True)
    expv = jnp.exp(logits)
    attn = expv / jnp.sum(expv, axis=-1, keepdims=True)

    # img + img * attention   (residual gate)
    o_ref[...] = (img * (1.0 + attn)).astype(o_ref.dtype)


# Rows handled as one gridless block; beyond this we tile the row axis.
_SINGLE_BLOCK_MAX_ROWS = 256
_ROW_TILE = 256


def bilinear_attention_forward(img, text,
                               w_img, b_img,
                               w_text, b_text,
                               w_out, b_out):
    """Fused BilinearAttention forward.  Returns (N, dim) like the PyTorch module."""
    dim = w_img.shape[0]
    img2 = img.reshape(-1, dim)
    text2 = text.reshape(-1, dim)
    n = img2.shape[0]

    cost = pl.CostEstimate(
        flops=int(6 * n * dim * dim + 6 * n * dim),
        transcendentals=int(3 * n * dim),
        bytes_accessed=int(4 * (3 * n * dim + 3 * dim * dim + 3 * dim)),
    )
    args = (img2, text2, w_img, b_img, w_text, b_text, w_out, b_out)

    if n <= _SINGLE_BLOCK_MAX_ROWS:
        # Single fused block: no grid, no per-step pipelining overhead,
        # everything resident in VMEM, lane-dense (dim % 128 == 0) output.
        return pl.pallas_call(
            _bilinear_attention_kernel,
            out_shape=jax.ShapeDtypeStruct((n, dim), img2.dtype),
            cost_estimate=cost,
        )(*args)

    # Large batch: tile the independent row axis ("parallel" engages the
    # second TensorCore on v7x).  Weights/biases pinned to block (0,0) so
    # they are DMA'd once and stay resident.  Row tile of 256 keeps the
    # VMEM footprint (~4.5 MiB incl. double-buffered activations + 3 MiB of
    # weights) far under the 32 MiB scoped default on every generation.
    tb = _ROW_TILE
    n_pad = pl.cdiv(n, tb) * tb
    if n_pad != n:
        pad = n_pad - n
        img2 = jnp.pad(img2, ((0, pad), (0, 0)))
        text2 = jnp.pad(text2, ((0, pad), (0, 0)))

    out = pl.pallas_call(
        _bilinear_attention_kernel,
        out_shape=jax.ShapeDtypeStruct((n_pad, dim), img2.dtype),
        grid=(n_pad // tb,),
        in_specs=[
            pl.BlockSpec((tb, dim), lambda i: (i, 0)),     # img rows
            pl.BlockSpec((tb, dim), lambda i: (i, 0)),     # text rows
            pl.BlockSpec((dim, dim), lambda i: (0, 0)),    # w_img  (resident)
            pl.BlockSpec((1, dim), lambda i: (0, 0)),      # b_img
            pl.BlockSpec((dim, dim), lambda i: (0, 0)),    # w_text (resident)
            pl.BlockSpec((1, dim), lambda i: (0, 0)),      # b_text
            pl.BlockSpec((dim, dim), lambda i: (0, 0)),    # w_out  (resident)
            pl.BlockSpec((1, dim), lambda i: (0, 0)),      # b_out
        ],
        out_specs=pl.BlockSpec((tb, dim), lambda i: (i, 0)),
        compiler_params=pltpu.CompilerParams(
            dimension_semantics=("parallel",)),
        cost_estimate=cost,
    )(img2, text2, w_img, b_img, w_text, b_text, w_out, b_out)
    return out[:n]


def _reference(img, text, w_img, b_img, w_text, b_text, w_out, b_out, dim):
    """Plain-JAX reference of the same forward pass (eval mode)."""
    img2 = img.reshape(-1, dim)
    text2 = text.reshape(-1, dim)
    img_f = jnp.tanh(img2 @ w_img + b_img)
    text_f = jnp.tanh(text2 @ w_text + b_text)
    hadamard = img_f * text_f
    attn = jax.nn.softmax(hadamard @ w_out + b_out, axis=-1)
    return img2 + img2 * attn


if __name__ == "__main__":
    dim = 512                     # BilinearAttention(dim=512) default
    batch, seq = 2, 4             # img/text: (2, 4, 512) -> viewed as (8, 512)

    key = jax.random.PRNGKey(0)
    (k_img, k_text, k_wi, k_wt, k_wo,
     k_bi, k_bt, k_bo, k_img2, k_text2) = jax.random.split(key, 10)

    img = jax.random.normal(k_img, (batch, seq, dim), dtype=jnp.float32)
    text = jax.random.normal(k_text, (batch, seq, dim), dtype=jnp.float32)

    scale = 1.0 / np.sqrt(dim)
    w_img = jax.random.normal(k_wi, (dim, dim), dtype=jnp.float32) * scale
    w_text = jax.random.normal(k_wt, (dim, dim), dtype=jnp.float32) * scale
    w_out = jax.random.normal(k_wo, (dim, dim), dtype=jnp.float32) * scale
    b_img = jax.random.normal(k_bi, (1, dim), dtype=jnp.float32) * 0.01
    b_text = jax.random.normal(k_bt, (1, dim), dtype=jnp.float32) * 0.01
    b_out = jax.random.normal(k_bo, (1, dim), dtype=jnp.float32) * 0.01

    # --- small batch: gridless single-block path ---
    out = bilinear_attention_forward(img, text, w_img, b_img,
                                     w_text, b_text, w_out, b_out)
    out = jax.block_until_ready(out)
    ref = _reference(img, text, w_img, b_img, w_text, b_text, w_out, b_out, dim)
    assert out.shape == (batch * seq, dim)
    np.testing.assert_allclose(np.asarray(out), np.asarray(ref),
                               rtol=1e-4, atol=1e-5)

    # --- larger batch: tiled-grid ("parallel" rows) path, incl. row padding ---
    img_l = jax.random.normal(k_img2, (3, 100, dim), dtype=jnp.float32)
    text_l = jax.random.normal(k_text2, (3, 100, dim), dtype=jnp.float32)
    out_l = bilinear_attention_forward(img_l, text_l, w_img, b_img,
                                       w_text, b_text, w_out, b_out)
    out_l = jax.block_until_ready(out_l)
    ref_l = _reference(img_l, text_l, w_img, b_img, w_text, b_text,
                       w_out, b_out, dim)
    assert out_l.shape == (300, dim)
    np.testing.assert_allclose(np.asarray(out_l), np.asarray(ref_l),
                               rtol=1e-4, atol=1e-5)

    print("KERNEL_OK")
</pallas_src>

<mosaic_0001>
module attributes {stable_mosaic.version = 11 : i64} {
  func.func @_bilinear_attention_kernel(%arg0: memref<8x512xf32, #tpu.memory_space<vmem>>, %arg1: memref<8x512xf32, #tpu.memory_space<vmem>>, %arg2: memref<512x512xf32, #tpu.memory_space<vmem>>, %arg3: memref<1x512xf32, #tpu.memory_space<vmem>>, %arg4: memref<512x512xf32, #tpu.memory_space<vmem>>, %arg5: memref<1x512xf32, #tpu.memory_space<vmem>>, %arg6: memref<512x512xf32, #tpu.memory_space<vmem>>, %arg7: memref<1x512xf32, #tpu.memory_space<vmem>>, %arg8: memref<8x512xf32, #tpu.memory_space<vmem>>) attributes {dimension_semantics = [], scalar_prefetch = 0 : i64, scratch_operands = 0 : i64, tpu.core_type = #tpu.core_type<tc>} {
    %c0 = arith.constant 0 : index
    %c0_0 = arith.constant 0 : index
    %0 = vector.load %arg0[%c0, %c0_0] : memref<8x512xf32, #tpu.memory_space<vmem>>, vector<8x512xf32>
    %c0_1 = arith.constant 0 : index
    %c0_2 = arith.constant 0 : index
    %1 = vector.load %arg1[%c0_1, %c0_2] : memref<8x512xf32, #tpu.memory_space<vmem>>, vector<8x512xf32>
    %c0_3 = arith.constant 0 : index
    %c0_4 = arith.constant 0 : index
    %2 = vector.load %arg2[%c0_3, %c0_4] : memref<512x512xf32, #tpu.memory_space<vmem>>, vector<512x512xf32>
    %cst = arith.constant dense<0.000000e+00> : vector<8x512xf32>
    %3 = tpu.matmul %0, %2, %cst {dimension_numbers = #tpu.dot_dimension_numbers<[1], [0], [0], [1], [0, 0, 1, 1], [], []>} : vector<8x512xf32>, vector<512x512xf32>, vector<8x512xf32> -> vector<8x512xf32>
    %c0_5 = arith.constant 0 : index
    %c0_6 = arith.constant 0 : index
    %4 = vector.load %arg3[%c0_5, %c0_6] : memref<1x512xf32, #tpu.memory_space<vmem>>, vector<1x512xf32>
    %5 = vector.broadcast %4 : vector<1x512xf32> to vector<8x512xf32>
    %6 = arith.addf %3, %5 : vector<8x512xf32>
    %7 = math.tanh %6 : vector<8x512xf32>
    %c0_7 = arith.constant 0 : index
    %c0_8 = arith.constant 0 : index
    %8 = vector.load %arg4[%c0_7, %c0_8] : memref<512x512xf32, #tpu.memory_space<vmem>>, vector<512x512xf32>
    %cst_9 = arith.constant dense<0.000000e+00> : vector<8x512xf32>
    %9 = tpu.matmul %1, %8, %cst_9 {dimension_numbers = #tpu.dot_dimension_numbers<[1], [0], [0], [1], [0, 0, 1, 1], [], []>} : vector<8x512xf32>, vector<512x512xf32>, vector<8x512xf32> -> vector<8x512xf32>
    %c0_10 = arith.constant 0 : index
    %c0_11 = arith.constant 0 : index
    %10 = vector.load %arg5[%c0_10, %c0_11] : memref<1x512xf32, #tpu.memory_space<vmem>>, vector<1x512xf32>
    %11 = vector.broadcast %10 : vector<1x512xf32> to vector<8x512xf32>
    %12 = arith.addf %9, %11 : vector<8x512xf32>
    %13 = math.tanh %12 : vector<8x512xf32>
    %14 = arith.mulf %7, %13 : vector<8x512xf32>
    %c0_12 = arith.constant 0 : index
    %c0_13 = arith.constant 0 : index
    %15 = vector.load %arg6[%c0_12, %c0_13] : memref<512x512xf32, #tpu.memory_space<vmem>>, vector<512x512xf32>
    %cst_14 = arith.constant dense<0.000000e+00> : vector<8x512xf32>
    %16 = tpu.matmul %14, %15, %cst_14 {dimension_numbers = #tpu.dot_dimension_numbers<[1], [0], [0], [1], [0, 0, 1, 1], [], []>} : vector<8x512xf32>, vector<512x512xf32>, vector<8x512xf32> -> vector<8x512xf32>
    %c0_15 = arith.constant 0 : index
    %c0_16 = arith.constant 0 : index
    %17 = vector.load %arg7[%c0_15, %c0_16] : memref<1x512xf32, #tpu.memory_space<vmem>>, vector<1x512xf32>
    %18 = vector.broadcast %17 : vector<1x512xf32> to vector<8x512xf32>
    %19 = arith.addf %16, %18 : vector<8x512xf32>
    %cst_17 = arith.constant dense<0xFF800000> : vector<8xf32>
    %20 = vector.multi_reduction <maximumf>, %19, %cst_17 [1] : vector<8x512xf32> to vector<8xf32>
    %21 = vector.shape_cast %20 : vector<8xf32> to vector<8x1xf32>
    %22 = vector.broadcast %21 : vector<8x1xf32> to vector<8x512xf32>
    %23 = arith.subf %19, %22 : vector<8x512xf32>
    %24 = math.exp %23 : vector<8x512xf32>
    %cst_18 = arith.constant dense<0.000000e+00> : vector<8xf32>
    %25 = vector.multi_reduction <add>, %24, %cst_18 [1] : vector<8x512xf32> to vector<8xf32>
    %26 = vector.shape_cast %25 : vector<8xf32> to vector<8x1xf32>
    %27 = vector.broadcast %26 : vector<8x1xf32> to vector<8x512xf32>
    %28 = arith.divf %24, %27 : vector<8x512xf32>
    %cst_19 = arith.constant 1.000000e+00 : f32
    %29 = vector.broadcast %cst_19 : f32 to vector<8x512xf32>
    %30 = arith.addf %29, %28 : vector<8x512xf32>
    %31 = arith.mulf %0, %30 : vector<8x512xf32>
    %c0_20 = arith.constant 0 : index
    %c0_21 = arith.constant 0 : index
    %32 = vector.load %arg8[%c0_20, %c0_21] : memref<8x512xf32, #tpu.memory_space<vmem>>, vector<8x512xf32>
    tpu.vector_store %arg8[%c0_20, %c0_21], %31 {strides = array<i32>} : memref<8x512xf32, #tpu.memory_space<vmem>>, vector<8x512xf32>,
    return
  }
}

</mosaic_0001>

<llo_original>
// kernel: tpu_custom_call.1
$region0: #{tpu_custom_call.1}
  #allocation0 [shape = 'u32[]', space=smem, size = 0x4, offset = 0x4, fixed_abs, tag = 'smem constant byte address 0x4 - core index']
  #allocation1 [shape = 'u32[144,128]{1,0:T(1,128)}', space=vmem, size = 0x12000, scoped, tag = 'internal scratch']
  %s0 = inlined_call_operand.hbm [shape: f32[8,512], index: 0, kind: input, shape index: {}]
  %s1 = inlined_call_operand.hbm [shape: f32[8,512], index: 1, kind: input, shape index: {}]
  %s2 = inlined_call_operand.hbm [shape: f32[512,512], index: 2, kind: input, shape index: {}]
  %s3 = inlined_call_operand.vmem [shape: f32[1,512], index: 3, kind: input, shape index: {}]
  %s4 = inlined_call_operand.hbm [shape: f32[512,512], index: 4, kind: input, shape index: {}]
  %s5 = inlined_call_operand.vmem [shape: f32[1,512], index: 5, kind: input, shape index: {}]
  %s6 = inlined_call_operand.hbm [shape: f32[512,512], index: 6, kind: input, shape index: {}]
  %s7 = inlined_call_operand.vmem [shape: f32[1,512], index: 7, kind: input, shape index: {}]
  %s8 = inlined_call_operand.hbm [shape: f32[8,512], index: 8, kind: output, shape index: {}]
  %s9 = sld [smem:[#allocation0]]
  $region62: #{tpu_custom_call.1} parent=0
    _
  %s11 = ssub.s32 1, %s9
  %s12 = scalar_select 0, %s11, %s9
  $region1: #{tpu_custom_call.1} parent=0
    #allocation2 [shape = 'u8[16384]{0}', space=vmem, size = 0x4000, scoped, tag = 'input window, operand 0, single buffered']
    #allocation3 [shape = 's32[1]{0}', space=sflag, size = 0x4, scoped, tag = 'scoped memory for tpu_custom_call.1']
    #allocation4 [shape = 's32[1]{0}', space=sflag, size = 0x4, scoped, tag = 'scoped memory for tpu_custom_call.1']
    #allocation5 [shape = 'u8[16384]{0}', space=vmem, size = 0x4000, scoped, tag = 'input window, operand 1, single buffered']
    #allocation6 [shape = 's32[1]{0}', space=sflag, size = 0x4, scoped, tag = 'scoped memory for tpu_custom_call.1']
    #allocation7 [shape = 'u8[1048576]{0}', space=vmem, size = 0x100000, scoped, tag = 'input window, operand 2, single buffered']
    #allocation8 [shape = 'u8[1048576]{0}', space=vmem, size = 0x100000, scoped, tag = 'input window, operand 4, single buffered']
    #allocation9 [shape = 's32[1]{0}', space=sflag, size = 0x4, scoped, tag = 'scoped memory for tpu_custom_call.1']
    #allocation10 [shape = 'u8[1048576]{0}', space=vmem, size = 0x100000, scoped, tag = 'input window, operand 6, single buffered']
    #allocation11 [shape = 'u8[16384]{0}', space=vmem, size = 0x4000, scoped, tag = 'output window, operand 0, single buffered']
    %13 = vsyncpa [#allocation3], 0
    %14 = vsyncpa [#allocation6], 0
    %15 = vsyncpa [#allocation9], 0
    %16 = vsyncpa [#allocation4], 0
    // Predicated region
    $region2: #{tpu_custom_call.1} parent=1 // pred_check
      _
    $region3: #{tpu_custom_call.1} parent=1 // pred_check_branch
      %18 = sbr.rel (0) target = $region5
    $region4: #{tpu_custom_call.1} parent=1 // pred_region
      %s20 = ssub.s32 512, 512
      %21 = vsyncadd [#allocation3], %s20
      %s23 = sshll.u32 [#allocation2], 4
      %s24 = int_to_ptr.vmem [resolvable:$true] %s23
      %26 = dma.hbm_to_vmem [thread:$0]  %s0, 512, %s24, [#allocation3]
    $region5: #{tpu_custom_call.1} parent=1 // pred_fallthru
      _
    // Predicated region
    $region6: #{tpu_custom_call.1} parent=1 // pred_check
      _
    $region7: #{tpu_custom_call.1} parent=1 // pred_check_branch
      %28 = sbr.rel (0) target = $region9
    $region8: #{tpu_custom_call.1} parent=1 // pred_region
      %s30 = ssub.s32 512, 512
      %31 = vsyncadd [#allocation6], %s30
      %s33 = sshll.u32 [#allocation5], 4
      %s34 = int_to_ptr.vmem [resolvable:$true] %s33
      %36 = dma.hbm_to_vmem [thread:$0]  %s1, 512, %s34, [#allocation6]
    $region9: #{tpu_custom_call.1} parent=1 // pred_fallthru
      _
    // Predicated region
    $region10: #{tpu_custom_call.1} parent=1 // pred_check
      _
    $region11: #{tpu_custom_call.1} parent=1 // pred_check_branch
      %38 = sbr.rel (0) target = $region13
    $region12: #{tpu_custom_call.1} parent=1 // pred_region
      %s40 = ssub.s32 32768, 32768
      %41 = vsyncadd [#allocation6], %s40
      %s42 = sshll.u32 [#allocation7], 4
      %s43 = int_to_ptr.vmem [resolvable:$true] %s42
      %48 = dma.hbm_to_vmem [thread:$0]  %s2, 32768, %s43, [#allocation6], 512, 512, 32
    $region13: #{tpu_custom_call.1} parent=1 // pred_fallthru
      _
    // Predicated region
    $region14: #{tpu_custom_call.1} parent=1 // pred_check
      _
    $region15: #{tpu_custom_call.1} parent=1 // pred_check_branch
      %50 = sbr.rel (0) target = $region17
    $region16: #{tpu_custom_call.1} parent=1 // pred_region
      _
    $region17: #{tpu_custom_call.1} parent=1 // pred_fallthru
      _
    // Predicated region
    $region18: #{tpu_custom_call.1} parent=1 // pred_check
      _
    $region19: #{tpu_custom_call.1} parent=1 // pred_check_branch
      %52 = sbr.rel (0) target = $region21
    $region20: #{tpu_custom_call.1} parent=1 // pred_region
      %s54 = ssub.s32 32768, 32768
      %55 = vsyncadd [#allocation9], %s54
      %s56 = sshll.u32 [#allocation8], 4
      %s57 = int_to_ptr.vmem [resolvable:$true] %s56
      %62 = dma.hbm_to_vmem [thread:$0]  %s4, 32768, %s57, [#allocation9], 512, 512, 32
    $region21: #{tpu_custom_call.1} parent=1 // pred_fallthru
      _
    // Predicated region
    $region22: #{tpu_custom_call.1} parent=1 // pred_check
      _
    $region23: #{tpu_custom_call.1} parent=1 // pred_check_branch
      %64 = sbr.rel (0) target = $region25
    $region24: #{tpu_custom_call.1} parent=1 // pred_region
      _
    $region25: #{tpu_custom_call.1} parent=1 // pred_fallthru
      _
    // Predicated region
    $region26: #{tpu_custom_call.1} parent=1 // pred_check
      _
    $region27: #{tpu_custom_call.1} parent=1 // pred_check_branch
      %66 = sbr.rel (0) target = $region29
    $region28: #{tpu_custom_call.1} parent=1 // pred_region
      %s68 = ssub.s32 32768, 32768
      %69 = vsyncadd [#allocation9], %s68
      %s70 = sshll.u32 [#allocation10], 4
      %s71 = int_to_ptr.vmem [resolvable:$true] %s70
      %76 = dma.hbm_to_vmem [thread:$0]  %s6, 32768, %s71, [#allocation9], 512, 512, 32
    $region29: #{tpu_custom_call.1} parent=1 // pred_fallthru
      _
    // Predicated region
    $region30: #{tpu_custom_call.1} parent=1 // pred_check
      _
    $region31: #{tpu_custom_call.1} parent=1 // pred_check_branch
      %78 = sbr.rel (0) target = $region33
    $region32: #{tpu_custom_call.1} parent=1 // pred_region
      _
    $region33: #{tpu_custom_call.1} parent=1 // pred_fallthru
      _
    // Predicated region
    $region34: #{tpu_custom_call.1} parent=1 // pred_check
      _
    $region35: #{tpu_custom_call.1} parent=1 // pred_check_branch
      %80 = sbr.rel (0) target = $region37
    $region36: #{tpu_custom_call.1} parent=1 // pred_region
      %81 = dma.done [#allocation3], 512
    $region37: #{tpu_custom_call.1} parent=1 // pred_fallthru
      _
    // Predicated region
    $region38: #{tpu_custom_call.1} parent=1 // pred_check
      _
    $region39: #{tpu_custom_call.1} parent=1 // pred_check_branch
      %83 = sbr.rel (0) target = $region41
    $region40: #{tpu_custom_call.1} parent=1 // pred_region
      %84 = dma.done [#allocation6], 512
    $region41: #{tpu_custom_call.1} parent=1 // pred_fallthru
      _
    // Predicated region
    $region42: #{tpu_custom_call.1} parent=1 // pred_check
      _
    $region43: #{tpu_custom_call.1} parent=1 // pred_check_branch
      %86 = sbr.rel (0) target = $region45
    $region44: #{tpu_custom_call.1} parent=1 // pred_region
      %87 = dma.done [#allocation6], 32768
    $region45: #{tpu_custom_call.1} parent=1 // pred_fallthru
      _
    // Predicated region
    $region46: #{tpu_custom_call.1} parent=1 // pred_check
      _
    $region47: #{tpu_custom_call.1} parent=1 // pred_check_branch
      %89 = sbr.rel (0) target = $region49
    $region48: #{tpu_custom_call.1} parent=1 // pred_region
      %90 = dma.done [#allocation9], 32768
    $region49: #{tpu_custom_call.1} parent=1 // pred_fallthru
      _
    // Predicated region
    $region50: #{tpu_custom_call.1} parent=1 // pred_check
      _
    $region51: #{tpu_custom_call.1} parent=1 // pred_check_branch
      %92 = sbr.rel (0) target = $region53
    $region52: #{tpu_custom_call.1} parent=1 // pred_region
      %93 = dma.done [#allocation9], 32768
    $region53: #{tpu_custom_call.1} parent=1 // pred_fallthru
      _
    %v94 = vld [vmem:[#allocation2] sm:$0xff]
    %v95 = vld [vmem:[#allocation2 + $0x8] sm:$0xff]
    %v96 = vld [vmem:[#allocation2 + $0x10] sm:$0xff]
    %v97 = vld [vmem:[#allocation2 + $0x18] sm:$0xff]
    %v98 = vld [vmem:[#allocation5] sm:$0xff]
    %v99 = vld [vmem:[#allocation5 + $0x8] sm:$0xff]
    %v100 = vld [vmem:[#allocation5 + $0x10] sm:$0xff]
    %v101 = vld [vmem:[#allocation5 + $0x18] sm:$0xff]
    %v102 = vld [vmem:[#allocation7] sm:$0xff]
    %v103 = vld [vmem:[#allocation7 + $0x8] sm:$0xff]
    %v104 = vld [vmem:[#allocation7 + $0x10] sm:$0xff]
    %v105 = vld [vmem:[#allocation7 + $0x18] sm:$0xff]
    %v106 = vld [vmem:[#allocation7 + $0x20] sm:$0xff]
    %v107 = vld [vmem:[#allocation7 + $0x28] sm:$0xff]
    %v108 = vld [vmem:[#allocation7 + $0x30] sm:$0xff]
    %v109 = vld [vmem:[#allocation7 + $0x38] sm:$0xff]
    %v110 = vld [vmem:[#allocation7 + $0x40] sm:$0xff]
    %v111 = vld [vmem:[#allocation7 + $0x48] sm:$0xff]
    %v112 = vld [vmem:[#allocation7 + $0x50] sm:$0xff]
    %v113 = vld [vmem:[#allocation7 + $0x58] sm:$0xff]
    %v114 = vld [vmem:[#allocation7 + $0x60] sm:$0xff]
    %v115 = vld [vmem:[#allocation7 + $0x68] sm:$0xff]
    %v116 = vld [vmem:[#allocation7 + $0x70] sm:$0xff]
    %v117 = vld [vmem:[#allocation7 + $0x78] sm:$0xff]
    %v118 = vld [vmem:[#allocation7 + $0x80] sm:$0xff]
    %v119 = vld [vmem:[#allocation7 + $0x88] sm:$0xff]
    %v120 = vld [vmem:[#allocation7 + $0x90] sm:$0xff]
    %v121 = vld [vmem:[#allocation7 + $0x98] sm:$0xff]
    %v122 = vld [vmem:[#allocation7 + $0xa0] sm:$0xff]
    %v123 = vld [vmem:[#allocation7 + $0xa8] sm:$0xff]
    %v124 = vld [vmem:[#allocation7 + $0xb0] sm:$0xff]
    %v125 = vld [vmem:[#allocation7 + $0xb8] sm:$0xff]
    %v126 = vld [vmem:[#allocation7 + $0xc0] sm:$0xff]
    %v127 = vld [vmem:[#allocation7 + $0xc8] sm:$0xff]
    %v128 = vld [vmem:[#allocation7 + $0xd0] sm:$0xff]
    %v129 = vld [vmem:[#allocation7 + $0xd8] sm:$0xff]
    %v130 = vld [vmem:[#allocation7 + $0xe0] sm:$0xff]
    %v131 = vld [vmem:[#allocation7 + $0xe8] sm:$0xff]
    %v132 = vld [vmem:[#allocation7 + $0xf0] sm:$0xff]
    %v133 = vld [vmem:[#allocation7 + $0xf8] sm:$0xff]
    %v134 = vld [vmem:[#allocation7 + $0x100] sm:$0xff]
    %v135 = vld [vmem:[#allocation7 + $0x108] sm:$0xff]
    %v136 = vld [vmem:[#allocation7 + $0x110] sm:$0xff]
    %v137 = vld [vmem:[#allocation7 + $0x118] sm:$0xff]
    %v138 = vld [vmem:[#allocation7 + $0x120] sm:$0xff]
    %v139 = vld [vmem:[#allocation7 + $0x128] sm:$0xff]
    %v140 = vld [vmem:[#allocation7 + $0x130] sm:$0xff]
    %v141 = vld [vmem:[#allocation7 + $0x138] sm:$0xff]
    %v142 = vld [vmem:[#allocation7 + $0x140] sm:$0xff]
    %v143 = vld [vmem:[#allocation7 + $0x148] sm:$0xff]
    %v144 = vld [vmem:[#allocation7 + $0x150] sm:$0xff]
    %v145 = vld [vmem:[#allocation7 + $0x158] sm:$0xff]
    %v146 = vld [vmem:[#allocation7 + $0x160] sm:$0xff]
    %v147 = vld [vmem:[#allocation7 + $0x168] sm:$0xff]
    %v148 = vld [vmem:[#allocation7 + $0x170] sm:$0xff]
    %v149 = vld [vmem:[#allocation7 + $0x178] sm:$0xff]
    %v150 = vld [vmem:[#allocation7 + $0x180] sm:$0xff]
    %v151 = vld [vmem:[#allocation7 + $0x188] sm:$0xff]
    %v152 = vld [vmem:[#allocation7 + $0x190] sm:$0xff]
    %v153 = vld [vmem:[#allocation7 + $0x198] sm:$0xff]
    %v154 = vld [vmem:[#allocation7 + $0x1a0] sm:$0xff]
    %v155 = vld [vmem:[#allocation7 + $0x1a8] sm:$0xff]
    %v156 = vld [vmem:[#allocation7 + $0x1b0] sm:$0xff]
    %v157 = vld [vmem:[#allocation7 + $0x1b8] sm:$0xff]
    %v158 = vld [vmem:[#allocation7 + $0x1c0] sm:$0xff]
    %v159 = vld [vmem:[#allocation7 + $0x1c8] sm:$0xff]
    %v160 = vld [vmem:[#allocation7 + $0x1d0] sm:$0xff]
    %v161 = vld [vmem:[#allocation7 + $0x1d8] sm:$0xff]
    %v162 = vld [vmem:[#allocation7 + $0x1e0] sm:$0xff]
    %v163 = vld [vmem:[#allocation7 + $0x1e8] sm:$0xff]
    %v164 = vld [vmem:[#allocation7 + $0x1f0] sm:$0xff]
    %v165 = vld [vmem:[#allocation7 + $0x1f8] sm:$0xff]
    %v166 = vld [vmem:[#allocation7 + $0x200] sm:$0xff]
    %v167 = vld [vmem:[#allocation7 + $0x208] sm:$0xff]
    %v168 = vld [vmem:[#allocation7 + $0x210] sm:$0xff]
    %v169 = vld [vmem:[#allocation7 + $0x218] sm:$0xff]
    %v170 = vld [vmem:[#allocation7 + $0x220] sm:$0xff]
    %v171 = vld [vmem:[#allocation7 + $0x228] sm:$0xff]
    %v172 = vld [vmem:[#allocation7 + $0x230] sm:$0xff]
    %v173 = vld [vmem:[#allocation7 + $0x238] sm:$0xff]
    %v174 = vld [vmem:[#allocation7 + $0x240] sm:$0xff]
    %v175 = vld [vmem:[#allocation7 + $0x248] sm:$0xff]
    %v176 = vld [vmem:[#allocation7 + $0x250] sm:$0xff]
    %v177 = vld [vmem:[#allocation7 + $0x258] sm:$0xff]
    %v178 = vld [vmem:[#allocation7 + $0x260] sm:$0xff]
    %v179 = vld [vmem:[#allocation7 + $0x268] sm:$0xff]
    %v180 = vld [vmem:[#allocation7 + $0x270] sm:$0xff]
    %v181 = vld [vmem:[#allocation7 + $0x278] sm:$0xff]
    %v182 = vld [vmem:[#allocation7 + $0x280] sm:$0xff]
    %v183 = vld [vmem:[#allocation7 + $0x288] sm:$0xff]
    %v184 = vld [vmem:[#allocation7 + $0x290] sm:$0xff]
    %v185 = vld [vmem:[#allocation7 + $0x298] sm:$0xff]
    %v186 = vld [vmem:[#allocation7 + $0x2a0] sm:$0xff]
    %v187 = vld [vmem:[#allocation7 + $0x2a8] sm:$0xff]
    %v188 = vld [vmem:[#allocation7 + $0x2b0] sm:$0xff]
    %v189 = vld [vmem:[#allocation7 + $0x2b8] sm:$0xff]
    %v190 = vld [vmem:[#allocation7 + $0x2c0] sm:$0xff]
    %v191 = vld [vmem:[#allocation7 + $0x2c8] sm:$0xff]
    %v192 = vld [vmem:[#allocation7 + $0x2d0] sm:$0xff]
    %v193 = vld [vmem:[#allocation7 + $0x2d8] sm:$0xff]
    %v194 = vld [vmem:[#allocation7 + $0x2e0] sm:$0xff]
    %v195 = vld [vmem:[#allocation7 + $0x2e8] sm:$0xff]
    %v196 = vld [vmem:[#allocation7 + $0x2f0] sm:$0xff]
    %v197 = vld [vmem:[#allocation7 + $0x2f8] sm:$0xff]
    %v198 = vld [vmem:[#allocation7 + $0x300] sm:$0xff]
    %v199 = vld [vmem:[#allocation7 + $0x308] sm:$0xff]
    %v200 = vld [vmem:[#allocation7 + $0x310] sm:$0xff]
    %v201 = vld [vmem:[#allocation7 + $0x318] sm:$0xff]
    %v202 = vld [vmem:[#allocation7 + $0x320] sm:$0xff]
    %v203 = vld [vmem:[#allocation7 + $0x328] sm:$0xff]
    %v204 = vld [vmem:[#allocation7 + $0x330] sm:$0xff]
    %v205 = vld [vmem:[#allocation7 + $0x338] sm:$0xff]
    %v206 = vld [vmem:[#allocation7 + $0x340] sm:$0xff]
    %v207 = vld [vmem:[#allocation7 + $0x348] sm:$0xff]
    %v208 = vld [vmem:[#allocation7 + $0x350] sm:$0xff]
    %v209 = vld [vmem:[#allocation7 + $0x358] sm:$0xff]
    %v210 = vld [vmem:[#allocation7 + $0x360] sm:$0xff]
    %v211 = vld [vmem:[#allocation7 + $0x368] sm:$0xff]
    %v212 = vld [vmem:[#allocation7 + $0x370] sm:$0xff]
    %v213 = vld [vmem:[#allocation7 + $0x378] sm:$0xff]
    %v214 = vld [vmem:[#allocation7 + $0x380] sm:$0xff]
    %v215 = vld [vmem:[#allocation7 + $0x388] sm:$0xff]
    %v216 = vld [vmem:[#allocation7 + $0x390] sm:$0xff]
    %v217 = vld [vmem:[#allocation7 + $0x398] sm:$0xff]
    %v218 = vld [vmem:[#allocation7 + $0x3a0] sm:$0xff]
    %v219 = vld [vmem:[#allocation7 + $0x3a8] sm:$0xff]
    %v220 = vld [vmem:[#allocation7 + $0x3b0] sm:$0xff]
    %v221 = vld [vmem:[#allocation7 + $0x3b8] sm:$0xff]
    %v222 = vld [vmem:[#allocation7 + $0x3c0] sm:$0xff]
    %v223 = vld [vmem:[#allocation7 + $0x3c8] sm:$0xff]
    %v224 = vld [vmem:[#allocation7 + $0x3d0] sm:$0xff]
    %v225 = vld [vmem:[#allocation7 + $0x3d8] sm:$0xff]
    %v226 = vld [vmem:[#allocation7 + $0x3e0] sm:$0xff]
    %v227 = vld [vmem:[#allocation7 + $0x3e8] sm:$0xff]
    %v228 = vld [vmem:[#allocation7 + $0x3f0] sm:$0xff]
    %v229 = vld [vmem:[#allocation7 + $0x3f8] sm:$0xff]
    %v230 = vld [vmem:[#allocation7 + $0x400] sm:$0xff]
    %v231 = vld [vmem:[#allocation7 + $0x408] sm:$0xff]
    %v232 = vld [vmem:[#allocation7 + $0x410] sm:$0xff]
    %v233 = vld [vmem:[#allocation7 + $0x418] sm:$0xff]
    %v234 = vld [vmem:[#allocation7 + $0x420] sm:$0xff]
    %v235 = vld [vmem:[#allocation7 + $0x428] sm:$0xff]
    %v236 = vld [vmem:[#allocation7 + $0x430] sm:$0xff]
    %v237 = vld [vmem:[#allocation7 + $0x438] sm:$0xff]
    %v238 = vld [vmem:[#allocation7 + $0x440] sm:$0xff]
    %v239 = vld [vmem:[#allocation7 + $0x448] sm:$0xff]
    %v240 = vld [vmem:[#allocation7 + $0x450] sm:$0xff]
    %v241 = vld [vmem:[#allocation7 + $0x458] sm:$0xff]
    %v242 = vld [vmem:[#allocation7 + $0x460] sm:$0xff]
    %v243 = vld [vmem:[#allocation7 + $0x468] sm:$0xff]
    %v244 = vld [vmem:[#allocation7 + $0x470] sm:$0xff]
    %v245 = vld [vmem:[#allocation7 + $0x478] sm:$0xff]
    %v246 = vld [vmem:[#allocation7 + $0x480] sm:$0xff]
    %v247 = vld [vmem:[#allocation7 + $0x488] sm:$0xff]
    %v248 = vld [vmem:[#allocation7 + $0x490] sm:$0xff]
    %v249 = vld [vmem:[#allocation7 + $0x498] sm:$0xff]
    %v250 = vld [vmem:[#allocation7 + $0x4a0] sm:$0xff]
    %v251 = vld [vmem:[#allocation7 + $0x4a8] sm:$0xff]
    %v252 = vld [vmem:[#allocation7 + $0x4b0] sm:$0xff]
    %v253 = vld [vmem:[#allocation7 + $0x4b8] sm:$0xff]
    %v254 = vld [vmem:[#allocation7 + $0x4c0] sm:$0xff]
    %v255 = vld [vmem:[#allocation7 + $0x4c8] sm:$0xff]
    %v256 = vld [vmem:[#allocation7 + $0x4d0] sm:$0xff]
    %v257 = vld [vmem:[#allocation7 + $0x4d8] sm:$0xff]
    %v258 = vld [vmem:[#allocation7 + $0x4e0] sm:$0xff]
    %v259 = vld [vmem:[#allocation7 + $0x4e8] sm:$0xff]
    %v260 = vld [vmem:[#allocation7 + $0x4f0] sm:$0xff]
    %v261 = vld [vmem:[#allocation7 + $0x4f8] sm:$0xff]
    %v262 = vld [vmem:[#allocation7 + $0x500] sm:$0xff]
    %v263 = vld [vmem:[#allocation7 + $0x508] sm:$0xff]
    %v264 = vld [vmem:[#allocation7 + $0x510] sm:$0xff]
    %v265 = vld [vmem:[#allocation7 + $0x518] sm:$0xff]
    %v266 = vld [vmem:[#allocation7 + $0x520] sm:$0xff]
    %v267 = vld [vmem:[#allocation7 + $0x528] sm:$0xff]
    %v268 = vld [vmem:[#allocation7 + $0x530] sm:$0xff]
    %v269 = vld [vmem:[#allocation7 + $0x538] sm:$0xff]
    %v270 = vld [vmem:[#allocation7 + $0x540] sm:$0xff]
    %v271 = vld [vmem:[#allocation7 + $0x548] sm:$0xff]
    %v272 = vld [vmem:[#allocation7 + $0x550] sm:$0xff]
    %v273 = vld [vmem:[#allocation7 + $0x558] sm:$0xff]
    %v274 = vld [vmem:[#allocation7 + $0x560] sm:$0xff]
    %v275 = vld [vmem:[#allocation7 + $0x568] sm:$0xff]
    %v276 = vld [vmem:[#allocation7 + $0x570] sm:$0xff]
    %v277 = vld [vmem:[#allocation7 + $0x578] sm:$0xff]
    %v278 = vld [vmem:[#allocation7 + $0x580] sm:$0xff]
    %v279 = vld [vmem:[#allocation7 + $0x588] sm:$0xff]
    %v280 = vld [vmem:[#allocation7 + $0x590] sm:$0xff]
    %v281 = vld [vmem:[#allocation7 + $0x598] sm:$0xff]
    %v282 = vld [vmem:[#allocation7 + $0x5a0] sm:$0xff]
    %v283 = vld [vmem:[#allocation7 + $0x5a8] sm:$0xff]
    %v284 = vld [vmem:[#allocation7 + $0x5b0] sm:$0xff]
    %v285 = vld [vmem:[#allocation7 + $0x5b8] sm:$0xff]
    %v286 = vld [vmem:[#allocation7 + $0x5c0] sm:$0xff]
    %v287 = vld [vmem:[#allocation7 + $0x5c8] sm:$0xff]
    %v288 = vld [vmem:[#allocation7 + $0x5d0] sm:$0xff]
    %v289 = vld [vmem:[#allocation7 + $0x5d8] sm:$0xff]
    %v290 = vld [vmem:[#allocation7 + $0x5e0] sm:$0xff]
    %v291 = vld [vmem:[#allocation7 + $0x5e8] sm:$0xff]
    %v292 = vld [vmem:[#allocation7 + $0x5f0] sm:$0xff]
    %v293 = vld [vmem:[#allocation7 + $0x5f8] sm:$0xff]
    %v294 = vld [vmem:[#allocation7 + $0x600] sm:$0xff]
    %v295 = vld [vmem:[#allocation7 + $0x608] sm:$0xff]
    %v296 = vld [vmem:[#allocation7 + $0x610] sm:$0xff]
    %v297 = vld [vmem:[#allocation7 + $0x618] sm:$0xff]
    %v298 = vld [vmem:[#allocation7 + $0x620] sm:$0xff]
    %v299 = vld [vmem:[#allocation7 + $0x628] sm:$0xff]
    %v300 = vld [vmem:[#allocation7 + $0x630] sm:$0xff]
    %v301 = vld [vmem:[#allocation7 + $0x638] sm:$0xff]
    %v302 = vld [vmem:[#allocation7 + $0x640] sm:$0xff]
    %v303 = vld [vmem:[#allocation7 + $0x648] sm:$0xff]
    %v304 = vld [vmem:[#allocation7 + $0x650] sm:$0xff]
    %v305 = vld [vmem:[#allocation7 + $0x658] sm:$0xff]
    %v306 = vld [vmem:[#allocation7 + $0x660] sm:$0xff]
    %v307 = vld [vmem:[#allocation7 + $0x668] sm:$0xff]
    %v308 = vld [vmem:[#allocation7 + $0x670] sm:$0xff]
    %v309 = vld [vmem:[#allocation7 + $0x678] sm:$0xff]
    %v310 = vld [vmem:[#allocation7 + $0x680] sm:$0xff]
    %v311 = vld [vmem:[#allocation7 + $0x688] sm:$0xff]
    %v312 = vld [vmem:[#allocation7 + $0x690] sm:$0xff]
    %v313 = vld [vmem:[#allocation7 + $0x698] sm:$0xff]
    %v314 = vld [vmem:[#allocation7 + $0x6a0] sm:$0xff]
    %v315 = vld [vmem:[#allocation7 + $0x6a8] sm:$0xff]
    %v316 = vld [vmem:[#allocation7 + $0x6b0] sm:$0xff]
    %v317 = vld [vmem:[#allocation7 + $0x6b8] sm:$0xff]
    %v318 = vld [vmem:[#allocation7 + $0x6c0] sm:$0xff]
    %v319 = vld [vmem:[#allocation7 + $0x6c8] sm:$0xff]
    %v320 = vld [vmem:[#allocation7 + $0x6d0] sm:$0xff]
    %v321 = vld [vmem:[#allocation7 + $0x6d8] sm:$0xff]
    %v322 = vld [vmem:[#allocation7 + $0x6e0] sm:$0xff]
    %v323 = vld [vmem:[#allocation7 + $0x6e8] sm:$0xff]
    %v324 = vld [vmem:[#allocation7 + $0x6f0] sm:$0xff]
    %v325 = vld [vmem:[#allocation7 + $0x6f8] sm:$0xff]
    %v326 = vld [vmem:[#allocation7 + $0x700] sm:$0xff]
    %v327 = vld [vmem:[#allocation7 + $0x708] sm:$0xff]
    %v328 = vld [vmem:[#allocation7 + $0x710] sm:$0xff]
    %v329 = vld [vmem:[#allocation7 + $0x718] sm:$0xff]
    %v330 = vld [vmem:[#allocation7 + $0x720] sm:$0xff]
    %v331 = vld [vmem:[#allocation7 + $0x728] sm:$0xff]
    %v332 = vld [vmem:[#allocation7 + $0x730] sm:$0xff]
    %v333 = vld [vmem:[#allocation7 + $0x738] sm:$0xff]
    %v334 = vld [vmem:[#allocation7 + $0x740] sm:$0xff]
    %v335 = vld [vmem:[#allocation7 + $0x748] sm:$0xff]
    %v336 = vld [vmem:[#allocation7 + $0x750] sm:$0xff]
    %v337 = vld [vmem:[#allocation7 + $0x758] sm:$0xff]
    %v338 = vld [vmem:[#allocation7 + $0x760] sm:$0xff]
    %v339 = vld [vmem:[#allocation7 + $0x768] sm:$0xff]
    %v340 = vld [vmem:[#allocation7 + $0x770] sm:$0xff]
    %v341 = vld [vmem:[#allocation7 + $0x778] sm:$0xff]
    %v342 = vld [vmem:[#allocation7 + $0x780] sm:$0xff]
    %v343 = vld [vmem:[#allocation7 + $0x788] sm:$0xff]
    %v344 = vld [vmem:[#allocation7 + $0x790] sm:$0xff]
    %v345 = vld [vmem:[#allocation7 + $0x798] sm:$0xff]
    %v346 = vld [vmem:[#allocation7 + $0x7a0] sm:$0xff]
    %v347 = vld [vmem:[#allocation7 + $0x7a8] sm:$0xff]
    %v348 = vld [vmem:[#allocation7 + $0x7b0] sm:$0xff]
    %v349 = vld [vmem:[#allocation7 + $0x7b8] sm:$0xff]
    %v350 = vld [vmem:[#allocation7 + $0x7c0] sm:$0xff]
    %v351 = vld [vmem:[#allocation7 + $0x7c8] sm:$0xff]
    %v352 = vld [vmem:[#allocation7 + $0x7d0] sm:$0xff]
    %v353 = vld [vmem:[#allocation7 + $0x7d8] sm:$0xff]
    %v354 = vld [vmem:[#allocation7 + $0x7e0] sm:$0xff]
    %v355 = vld [vmem:[#allocation7 + $0x7e8] sm:$0xff]
    %v356 = vld [vmem:[#allocation7 + $0x7f0] sm:$0xff]
    %v357 = vld [vmem:[#allocation7 + $0x7f8] sm:$0xff]
    %v358 = vld [vmem:[%s3] sm:$0xf]
    %v360 = vlaneseq
    %v361 = vshrl.u32 %v360, 7
    %v362 = vsub.s32 0, %v361
    %v363 = vrot.slane %v358, %v362
    %v364 = vlaneseq
    %v365 = vshrl.u32 %v364, 7
    %v366 = vsub.s32 1, %v365
    %v367 = vrot.slane %v358, %v366
    %v368 = vlaneseq
    %v369 = vshrl.u32 %v368, 7
    %v370 = vsub.s32 2, %v369
    %v371 = vrot.slane %v358, %v370
    %v372 = vlaneseq
    %v373 = vshrl.u32 %v372, 7
    %v374 = vsub.s32 3, %v373
    %v375 = vrot.slane %v358, %v374
    %380 = vmatprep.subr.mxu0 %v103
    %381 = vmatpush1.msra.mxu0 %v102
    %382 = vmatprep.subr.mxu0 %v107
    %383 = vmatpush1.msra.mxu0 %v106
    %384 = vmatprep.subr.mxu0 %v111
    %385 = vmatpush1.msra.mxu0 %v110
    %386 = vmatprep.subr.mxu0 %v115
    %387 = vmatpush1.msra.mxu0 %v114
    %388 = vmatprep.subr.mxu0 %v119
    %389 = vmatpush1.msra.mxu0 %v118
    %390 = vmatprep.subr.mxu0 %v123
    %391 = vmatpush1.msra.mxu0 %v122
    %392 = vmatprep.subr.mxu0 %v127
    %393 = vmatpush1.msra.mxu0 %v126
    %394 = vmatprep.subr.mxu0 %v131
    %395 = vmatpush1.msra.mxu0 %v130
    %396 = vmatprep.subr.mxu0 %v135
    %397 = vmatpush1.msra.mxu0 %v134
    %398 = vmatprep.subr.mxu0 %v139
    %399 = vmatpush1.msra.mxu0 %v138
    %400 = vmatprep.subr.mxu0 %v143
    %401 = vmatpush1.msra.mxu0 %v142
    %402 = vmatprep.subr.mxu0 %v147
    %403 = vmatpush1.msra.mxu0 %v146
    %404 = vmatprep.subr.mxu0 %v151
    %405 = vmatpush1.msra.mxu0 %v150
    %406 = vmatprep.subr.mxu0 %v155
    %407 = vmatpush1.msra.mxu0 %v154
    %408 = vmatprep.subr.mxu0 %v159
    %409 = vmatpush1.msra.mxu0 %v158
    %410 = vmatprep.subr.mxu0 %v163
    %411 = vmatpush1.msra.mxu0 %v162
    %412 = vmatprep.subr.mxu0 %v167
    %413 = vmatpush1.msra.mxu0 %v166
    %414 = vmatprep.subr.mxu0 %v171
    %415 = vmatpush1.msra.mxu0 %v170
    %416 = vmatprep.subr.mxu0 %v175
    %417 = vmatpush1.msra.mxu0 %v174
    %418 = vmatprep.subr.mxu0 %v179
    %419 = vmatpush1.msra.mxu0 %v178
    %420 = vmatprep.subr.mxu0 %v183
    %421 = vmatpush1.msra.mxu0 %v182
    %422 = vmatprep.subr.mxu0 %v187
    %423 = vmatpush1.msra.mxu0 %v186
    %424 = vmatprep.subr.mxu0 %v191
    %425 = vmatpush1.msra.mxu0 %v190
    %426 = vmatprep.subr.mxu0 %v195
    %427 = vmatpush1.msra.mxu0 %v194
    %428 = vmatprep.subr.mxu0 %v199
    %429 = vmatpush1.msra.mxu0 %v198
    %430 = vmatprep.subr.mxu0 %v203
    %431 = vmatpush1.msra.mxu0 %v202
    %432 = vmatprep.subr.mxu0 %v207
    %433 = vmatpush1.msra.mxu0 %v206
    %434 = vmatprep.subr.mxu0 %v211
    %435 = vmatpush1.msra.mxu0 %v210
    %436 = vmatprep.subr.mxu0 %v215
    %437 = vmatpush1.msra.mxu0 %v214
    %438 = vmatprep.subr.mxu0 %v219
    %439 = vmatpush1.msra.mxu0 %v218
    %440 = vmatprep.subr.mxu0 %v223
    %441 = vmatpush1.msra.mxu0 %v222
    %442 = vmatprep.subr.mxu0 %v227
    %443 = vmatpush1.msra.mxu0 %v226
    %444 = vmatprep.mubr.f32.mxu0 %v95
    %445 = vmatmul.mubr.f32.gmra.mrb[0].mxu0 %v94
    %v446 = vpop.f32.mrb[0].mxu0
    %v447 = vadd.f32 %v363, %v446
    %v448 = vpop.f32.mrb[0].mxu0
    %v449 = vadd.f32 %v367, %v448
    %450 = vdwg.mxu0
    %451 = vmatprep.subr.mxu0 %v231
    %452 = vmatpush1.msra.mxu0 %v230
    %453 = vmatprep.subr.mxu0 %v235
    %454 = vmatpush1.msra.mxu0 %v234
    %455 = vmatprep.subr.mxu0 %v239
    %456 = vmatpush1.msra.mxu0 %v238
    %457 = vmatprep.subr.mxu0 %v243
    %458 = vmatpush1.msra.mxu0 %v242
    %459 = vmatprep.subr.mxu0 %v247
    %460 = vmatpush1.msra.mxu0 %v246
    %461 = vmatprep.subr.mxu0 %v251
    %462 = vmatpush1.msra.mxu0 %v250
    %463 = vmatprep.subr.mxu0 %v255
    %464 = vmatpush1.msra.mxu0 %v254
    %465 = vmatprep.subr.mxu0 %v259
    %466 = vmatpush1.msra.mxu0 %v258
    %467 = vmatprep.subr.mxu0 %v263
    %468 = vmatpush1.msra.mxu0 %v262
    %469 = vmatprep.subr.mxu0 %v267
    %470 = vmatpush1.msra.mxu0 %v266
    %471 = vmatprep.subr.mxu0 %v271
    %472 = vmatpush1.msra.mxu0 %v270
    %473 = vmatprep.subr.mxu0 %v275
    %474 = vmatpush1.msra.mxu0 %v274
    %475 = vmatprep.subr.mxu0 %v279
    %476 = vmatpush1.msra.mxu0 %v278
    %477 = vmatprep.subr.mxu0 %v283
    %478 = vmatpush1.msra.mxu0 %v282
    %479 = vmatprep.subr.mxu0 %v287
    %480 = vmatpush1.msra.mxu0 %v286
    %481 = vmatprep.subr.mxu0 %v291
    %482 = vmatpush1.msra.mxu0 %v290
    %483 = vmatprep.subr.mxu0 %v295
    %484 = vmatpush1.msra.mxu0 %v294
    %485 = vmatprep.subr.mxu0 %v299
    %486 = vmatpush1.msra.mxu0 %v298
    %487 = vmatprep.subr.mxu0 %v303
    %488 = vmatpush1.msra.mxu0 %v302
    %489 = vmatprep.subr.mxu0 %v307
    %490 = vmatpush1.msra.mxu0 %v306
    %491 = vmatprep.subr.mxu0 %v311
    %492 = vmatpush1.msra.mxu0 %v310
    %493 = vmatprep.subr.mxu0 %v315
    %494 = vmatpush1.msra.mxu0 %v314
    %495 = vmatprep.subr.mxu0 %v319
    %496 = vmatpush1.msra.mxu0 %v318
    %497 = vmatprep.subr.mxu0 %v323
    %498 = vmatpush1.msra.mxu0 %v322
    %499 = vmatprep.subr.mxu0 %v327
    %500 = vmatpush1.msra.mxu0 %v326
    %501 = vmatprep.subr.mxu0 %v331
    %502 = vmatpush1.msra.mxu0 %v330
    %503 = vmatprep.subr.mxu0 %v335
    %504 = vmatpush1.msra.mxu0 %v334
    %505 = vmatprep.subr.mxu0 %v339
    %506 = vmatpush1.msra.mxu0 %v338
    %507 = vmatprep.subr.mxu0 %v343
    %508 = vmatpush1.msra.mxu0 %v342
    %509 = vmatprep.subr.mxu0 %v347
    %510 = vmatpush1.msra.mxu0 %v346
    %511 = vmatprep.subr.mxu0 %v351
    %512 = vmatpush1.msra.mxu0 %v350
    %513 = vmatprep.subr.mxu0 %v355
    %514 = vmatpush1.msra.mxu0 %v354
    %515 = vmatprep.mubr.f32.mxu0 %v97
    %516 = vmatmul.mubr.f32.gmra.mrb[0].mxu0 %v96
    %v517 = vpop.f32.mrb[0].mxu0
    %v518 = vadd.f32 %v447, %v517
    %v519 = vpop.f32.mrb[0].mxu0
    %v520 = vadd.f32 %v449, %v519
    %521 = vdwg.mxu0
    %522 = vmatprep.subr.mxu0 %v105
    %523 = vmatpush1.msra.mxu0 %v104
    %524 = vmatprep.subr.mxu0 %v109
    %525 = vmatpush1.msra.mxu0 %v108
    %526 = vmatprep.subr.mxu0 %v113
    %527 = vmatpush1.msra.mxu0 %v112
    %528 = vmatprep.subr.mxu0 %v117
    %529 = vmatpush1.msra.mxu0 %v116
    %530 = vmatprep.subr.mxu0 %v121
    %531 = vmatpush1.msra.mxu0 %v120
    %532 = vmatprep.subr.mxu0 %v125
    %533 = vmatpush1.msra.mxu0 %v124
    %534 = vmatprep.subr.mxu0 %v129
    %535 = vmatpush1.msra.mxu0 %v128
    %536 = vmatprep.subr.mxu0 %v133
    %537 = vmatpush1.msra.mxu0 %v132
    %538 = vmatprep.subr.mxu0 %v137
    %539 = vmatpush1.msra.mxu0 %v136
    %540 = vmatprep.subr.mxu0 %v141
    %541 = vmatpush1.msra.mxu0 %v140
    %542 = vmatprep.subr.mxu0 %v145
    %543 = vmatpush1.msra.mxu0 %v144
    %544 = vmatprep.subr.mxu0 %v149
    %545 = vmatpush1.msra.mxu0 %v148
    %546 = vmatprep.subr.mxu0 %v153
    %547 = vmatpush1.msra.mxu0 %v152
    %548 = vmatprep.subr.mxu0 %v157
    %549 = vmatpush1.msra.mxu0 %v156
    %550 = vmatprep.subr.mxu0 %v161
    %551 = vmatpush1.msra.mxu0 %v160
    %552 = vmatprep.subr.mxu0 %v165
    %553 = vmatpush1.msra.mxu0 %v164
    %554 = vmatprep.subr.mxu0 %v169
    %555 = vmatpush1.msra.mxu0 %v168
    %556 = vmatprep.subr.mxu0 %v173
    %557 = vmatpush1.msra.mxu0 %v172
    %558 = vmatprep.subr.mxu0 %v177
    %559 = vmatpush1.msra.mxu0 %v176
    %560 = vmatprep.subr.mxu0 %v181
    %561 = vmatpush1.msra.mxu0 %v180
    %562 = vmatprep.subr.mxu0 %v185
    %563 = vmatpush1.msra.mxu0 %v184
    %564 = vmatprep.subr.mxu0 %v189
    %565 = vmatpush1.msra.mxu0 %v188
    %566 = vmatprep.subr.mxu0 %v193
    %567 = vmatpush1.msra.mxu0 %v192
    %568 = vmatprep.subr.mxu0 %v197
    %569 = vmatpush1.msra.mxu0 %v196
    %570 = vmatprep.subr.mxu0 %v201
    %571 = vmatpush1.msra.mxu0 %v200
    %572 = vmatprep.subr.mxu0 %v205
    %573 = vmatpush1.msra.mxu0 %v204
    %574 = vmatprep.subr.mxu0 %v209
    %575 = vmatpush1.msra.mxu0 %v208
    %576 = vmatprep.subr.mxu0 %v213
    %577 = vmatpush1.msra.mxu0 %v212
    %578 = vmatprep.subr.mxu0 %v217
    %579 = vmatpush1.msra.mxu0 %v216
    %580 = vmatprep.subr.mxu0 %v221
    %581 = vmatpush1.msra.mxu0 %v220
    %582 = vmatprep.subr.mxu0 %v225
    %583 = vmatpush1.msra.mxu0 %v224
    %584 = vmatprep.subr.mxu0 %v229
    %585 = vmatpush1.msra.mxu0 %v228
    %586 = vmatprep.mubr.f32.mxu0 %v95
    %587 = vmatmul.mubr.f32.gmra.mrb[0].mxu0 %v94
    %v588 = vpop.f32.mrb[0].mxu0
    %v589 = vadd.f32 %v371, %v588
    %v590 = vpop.f32.mrb[0].mxu0
    %v591 = vadd.f32 %v375, %v590
    %592 = vdwg.mxu0
    %593 = vmatprep.subr.mxu0 %v233
    %594 = vmatpush1.msra.mxu0 %v232
    %595 = vmatprep.subr.mxu0 %v237
    %596 = vmatpush1.msra.mxu0 %v236
    %597 = vmatprep.subr.mxu0 %v241
    %598 = vmatpush1.msra.mxu0 %v240
    %599 = vmatprep.subr.mxu0 %v245
    %600 = vmatpush1.msra.mxu0 %v244
    %601 = vmatprep.subr.mxu0 %v249
    %602 = vmatpush1.msra.mxu0 %v248
    %603 = vmatprep.subr.mxu0 %v253
    %604 = vmatpush1.msra.mxu0 %v252
    %605 = vmatprep.subr.mxu0 %v257
    %606 = vmatpush1.msra.mxu0 %v256
    %607 = vmatprep.subr.mxu0 %v261
    %608 = vmatpush1.msra.mxu0 %v260
    %609 = vmatprep.subr.mxu0 %v265
    %610 = vmatpush1.msra.mxu0 %v264
    %611 = vmatprep.subr.mxu0 %v269
    %612 = vmatpush1.msra.mxu0 %v268
    %613 = vmatprep.subr.mxu0 %v273
    %614 = vmatpush1.msra.mxu0 %v272
    %615 = vmatprep.subr.mxu0 %v277
    %616 = vmatpush1.msra.mxu0 %v276
    %617 = vmatprep.subr.mxu0 %v281
    %618 = vmatpush1.msra.mxu0 %v280
    %619 = vmatprep.subr.mxu0 %v285
    %620 = vmatpush1.msra.mxu0 %v284
    %621 = vmatprep.subr.mxu0 %v289
    %622 = vmatpush1.msra.mxu0 %v288
    %623 = vmatprep.subr.mxu0 %v293
    %624 = vmatpush1.msra.mxu0 %v292
    %625 = vmatprep.subr.mxu0 %v297
    %626 = vmatpush1.msra.mxu0 %v296
    %627 = vmatprep.subr.mxu0 %v301
    %628 = vmatpush1.msra.mxu0 %v300
    %629 = vmatprep.subr.mxu0 %v305
    %630 = vmatpush1.msra.mxu0 %v304
    %631 = vmatprep.subr.mxu0 %v309
    %632 = vmatpush1.msra.mxu0 %v308
    %633 = vmatprep.subr.mxu0 %v313
    %634 = vmatpush1.msra.mxu0 %v312
    %635 = vmatprep.subr.mxu0 %v317
    %636 = vmatpush1.msra.mxu0 %v316
    %637 = vmatprep.subr.mxu0 %v321
    %638 = vmatpush1.msra.mxu0 %v320
    %639 = vmatprep.subr.mxu0 %v325
    %640 = vmatpush1.msra.mxu0 %v324
    %641 = vmatprep.subr.mxu0 %v329
    %642 = vmatpush1.msra.mxu0 %v328
    %643 = vmatprep.subr.mxu0 %v333
    %644 = vmatpush1.msra.mxu0 %v332
    %645 = vmatprep.subr.mxu0 %v337
    %646 = vmatpush1.msra.mxu0 %v336
    %647 = vmatprep.subr.mxu0 %v341
    %648 = vmatpush1.msra.mxu0 %v340
    %649 = vmatprep.subr.mxu0 %v345
    %650 = vmatpush1.msra.mxu0 %v344
    %651 = vmatprep.subr.mxu0 %v349
    %652 = vmatpush1.msra.mxu0 %v348
    %653 = vmatprep.subr.mxu0 %v353
    %654 = vmatpush1.msra.mxu0 %v352
    %655 = vmatprep.subr.mxu0 %v357
    %656 = vmatpush1.msra.mxu0 %v356
    %657 = vmatprep.mubr.f32.mxu0 %v97
    %658 = vmatmul.mubr.f32.gmra.mrb[0].mxu0 %v96
    %v659 = vpop.f32.mrb[0].mxu0
    %v660 = vadd.f32 %v589, %v659
    %v661 = vpop.f32.mrb[0].mxu0
    %v662 = vadd.f32 %v591, %v661
    %663 = vdwg.mxu0
    %v664 = vtanh.pop %v518
    %v665 = vtanh.pop %v520
    %v666 = vtanh.pop %v660
    %v667 = vtanh.pop %v662
    %v668 = vld [vmem:[#allocation8] sm:$0xff]
    %v669 = vld [vmem:[#allocation8 + $0x8] sm:$0xff]
    %v670 = vld [vmem:[#allocation8 + $0x10] sm:$0xff]
    %v671 = vld [vmem:[#allocation8 + $0x18] sm:$0xff]
    %v672 = vld [vmem:[#allocation8 + $0x20] sm:$0xff]
    %v673 = vld [vmem:[#allocation8 + $0x28] sm:$0xff]
    %v674 = vld [vmem:[#allocation8 + $0x30] sm:$0xff]
    %v675 = vld [vmem:[#allocation8 + $0x38] sm:$0xff]
    %v676 = vld [vmem:[#allocation8 + $0x40] sm:$0xff]
    %v677 = vld [vmem:[#allocation8 + $0x48] sm:$0xff]
    %v678 = vld [vmem:[#allocation8 + $0x50] sm:$0xff]
    %v679 = vld [vmem:[#allocation8 + $0x58] sm:$0xff]
    %v680 = vld [vmem:[#allocation8 + $0x60] sm:$0xff]
    %v681 = vld [vmem:[#allocation8 + $0x68] sm:$0xff]
    %v682 = vld [vmem:[#allocation8 + $0x70] sm:$0xff]
    %v683 = vld [vmem:[#allocation8 + $0x78] sm:$0xff]
    %v684 = vld [vmem:[#allocation8 + $0x80] sm:$0xff]
    %v685 = vld [vmem:[#allocation8 + $0x88] sm:$0xff]
    %v686 = vld [vmem:[#allocation8 + $0x90] sm:$0xff]
    %v687 = vld [vmem:[#allocation8 + $0x98] sm:$0xff]
    %v688 = vld [vmem:[#allocation8 + $0xa0] sm:$0xff]
    %v689 = vld [vmem:[#allocation8 + $0xa8] sm:$0xff]
    %v690 = vld [vmem:[#allocation8 + $0xb0] sm:$0xff]
    %v691 = vld [vmem:[#allocation8 + $0xb8] sm:$0xff]
    %v692 = vld [vmem:[#allocation8 + $0xc0] sm:$0xff]
    %v693 = vld [vmem:[#allocation8 + $0xc8] sm:$0xff]
    %v694 = vld [vmem:[#allocation8 + $0xd0] sm:$0xff]
    %v695 = vld [vmem:[#allocation8 + $0xd8] sm:$0xff]
    %v696 = vld [vmem:[#allocation8 + $0xe0] sm:$0xff]
    %v697 = vld [vmem:[#allocation8 + $0xe8] sm:$0xff]
    %v698 = vld [vmem:[#allocation8 + $0xf0] sm:$0xff]
    %v699 = vld [vmem:[#allocation8 + $0xf8] sm:$0xff]
    %v700 = vld [vmem:[#allocation8 + $0x100] sm:$0xff]
    %v701 = vld [vmem:[#allocation8 + $0x108] sm:$0xff]
    %v702 = vld [vmem:[#allocation8 + $0x110] sm:$0xff]
    %v703 = vld [vmem:[#allocation8 + $0x118] sm:$0xff]
    %v704 = vld [vmem:[#allocation8 + $0x120] sm:$0xff]
    %v705 = vld [vmem:[#allocation8 + $0x128] sm:$0xff]
    %v706 = vld [vmem:[#allocation8 + $0x130] sm:$0xff]
    %v707 = vld [vmem:[#allocation8 + $0x138] sm:$0xff]
    %v708 = vld [vmem:[#allocation8 + $0x140] sm:$0xff]
    %v709 = vld [vmem:[#allocation8 + $0x148] sm:$0xff]
    %v710 = vld [vmem:[#allocation8 + $0x150] sm:$0xff]
    %v711 = vld [vmem:[#allocation8 + $0x158] sm:$0xff]
    %v712 = vld [vmem:[#allocation8 + $0x160] sm:$0xff]
    %v713 = vld [vmem:[#allocation8 + $0x168] sm:$0xff]
    %v714 = vld [vmem:[#allocation8 + $0x170] sm:$0xff]
    %v715 = vld [vmem:[#allocation8 + $0x178] sm:$0xff]
    %v716 = vld [vmem:[#allocation8 + $0x180] sm:$0xff]
    %v717 = vld [vmem:[#allocation8 + $0x188] sm:$0xff]
    %v718 = vld [vmem:[#allocation8 + $0x190] sm:$0xff]
    %v719 = vld [vmem:[#allocation8 + $0x198] sm:$0xff]
    %v720 = vld [vmem:[#allocation8 + $0x1a0] sm:$0xff]
    %v721 = vld [vmem:[#allocation8 + $0x1a8] sm:$0xff]
    %v722 = vld [vmem:[#allocation8 + $0x1b0] sm:$0xff]
    %v723 = vld [vmem:[#allocation8 + $0x1b8] sm:$0xff]
    %v724 = vld [vmem:[#allocation8 + $0x1c0] sm:$0xff]
    %v725 = vld [vmem:[#allocation8 + $0x1c8] sm:$0xff]
    %v726 = vld [vmem:[#allocation8 + $0x1d0] sm:$0xff]
    %v727 = vld [vmem:[#allocation8 + $0x1d8] sm:$0xff]
    %v728 = vld [vmem:[#allocation8 + $0x1e0] sm:$0xff]
    %v729 = vld [vmem:[#allocation8 + $0x1e8] sm:$0xff]
    %v730 = vld [vmem:[#allocation8 + $0x1f0] sm:$0xff]
    %v731 = vld [vmem:[#allocation8 + $0x1f8] sm:$0xff]
    %v732 = vld [vmem:[#allocation8 + $0x200] sm:$0xff]
    %v733 = vld [vmem:[#allocation8 + $0x208] sm:$0xff]
    %v734 = vld [vmem:[#allocation8 + $0x210] sm:$0xff]
    %v735 = vld [vmem:[#allocation8 + $0x218] sm:$0xff]
    %v736 = vld [vmem:[#allocation8 + $0x220] sm:$0xff]
    %v737 = vld [vmem:[#allocation8 + $0x228] sm:$0xff]
    %v738 = vld [vmem:[#allocation8 + $0x230] sm:$0xff]
    %v739 = vld [vmem:[#allocation8 + $0x238] sm:$0xff]
    %v740 = vld [vmem:[#allocation8 + $0x240] sm:$0xff]
    %v741 = vld [vmem:[#allocation8 + $0x248] sm:$0xff]
    %v742 = vld [vmem:[#allocation8 + $0x250] sm:$0xff]
    %v743 = vld [vmem:[#allocation8 + $0x258] sm:$0xff]
    %v744 = vld [vmem:[#allocation8 + $0x260] sm:$0xff]
    %v745 = vld [vmem:[#allocation8 + $0x268] sm:$0xff]
    %v746 = vld [vmem:[#allocation8 + $0x270] sm:$0xff]
    %v747 = vld [vmem:[#allocation8 + $0x278] sm:$0xff]
    %v748 = vld [vmem:[#allocation8 + $0x280] sm:$0xff]
    %v749 = vld [vmem:[#allocation8 + $0x288] sm:$0xff]
    %v750 = vld [vmem:[#allocation8 + $0x290] sm:$0xff]
    %v751 = vld [vmem:[#allocation8 + $0x298] sm:$0xff]
    %v752 = vld [vmem:[#allocation8 + $0x2a0] sm:$0xff]
    %v753 = vld [vmem:[#allocation8 + $0x2a8] sm:$0xff]
    %v754 = vld [vmem:[#allocation8 + $0x2b0] sm:$0xff]
    %v755 = vld [vmem:[#allocation8 + $0x2b8] sm:$0xff]
    %v756 = vld [vmem:[#allocation8 + $0x2c0] sm:$0xff]
    %v757 = vld [vmem:[#allocation8 + $0x2c8] sm:$0xff]
    %v758 = vld [vmem:[#allocation8 + $0x2d0] sm:$0xff]
    %v759 = vld [vmem:[#allocation8 + $0x2d8] sm:$0xff]
    %v760 = vld [vmem:[#allocation8 + $0x2e0] sm:$0xff]
    %v761 = vld [vmem:[#allocation8 + $0x2e8] sm:$0xff]
    %v762 = vld [vmem:[#allocation8 + $0x2f0] sm:$0xff]
    %v763 = vld [vmem:[#allocation8 + $0x2f8] sm:$0xff]
    %v764 = vld [vmem:[#allocation8 + $0x300] sm:$0xff]
    %v765 = vld [vmem:[#allocation8 + $0x308] sm:$0xff]
    %v766 = vld [vmem:[#allocation8 + $0x310] sm:$0xff]
    %v767 = vld [vmem:[#allocation8 + $0x318] sm:$0xff]
    %v768 = vld [vmem:[#allocation8 + $0x320] sm:$0xff]
    %v769 = vld [vmem:[#allocation8 + $0x328] sm:$0xff]
    %v770 = vld [vmem:[#allocation8 + $0x330] sm:$0xff]
    %v771 = vld [vmem:[#allocation8 + $0x338] sm:$0xff]
    %v772 = vld [vmem:[#allocation8 + $0x340] sm:$0xff]
    %v773 = vld [vmem:[#allocation8 + $0x348] sm:$0xff]
    %v774 = vld [vmem:[#allocation8 + $0x350] sm:$0xff]
    %v775 = vld [vmem:[#allocation8 + $0x358] sm:$0xff]
    %v776 = vld [vmem:[#allocation8 + $0x360] sm:$0xff]
    %v777 = vld [vmem:[#allocation8 + $0x368] sm:$0xff]
    %v778 = vld [vmem:[#allocation8 + $0x370] sm:$0xff]
    %v779 = vld [vmem:[#allocation8 + $0x378] sm:$0xff]
    %v780 = vld [vmem:[#allocation8 + $0x380] sm:$0xff]
    %v781 = vld [vmem:[#allocation8 + $0x388] sm:$0xff]
    %v782 = vld [vmem:[#allocation8 + $0x390] sm:$0xff]
    %v783 = vld [vmem:[#allocation8 + $0x398] sm:$0xff]
    %v784 = vld [vmem:[#allocation8 + $0x3a0] sm:$0xff]
    %v785 = vld [vmem:[#allocation8 + $0x3a8] sm:$0xff]
    %v786 = vld [vmem:[#allocation8 + $0x3b0] sm:$0xff]
    %v787 = vld [vmem:[#allocation8 + $0x3b8] sm:$0xff]
    %v788 = vld [vmem:[#allocation8 + $0x3c0] sm:$0xff]
    %v789 = vld [vmem:[#allocation8 + $0x3c8] sm:$0xff]
    %v790 = vld [vmem:[#allocation8 + $0x3d0] sm:$0xff]
    %v791 = vld [vmem:[#allocation8 + $0x3d8] sm:$0xff]
    %v792 = vld [vmem:[#allocation8 + $0x3e0] sm:$0xff]
    %v793 = vld [vmem:[#allocation8 + $0x3e8] sm:$0xff]
    %v794 = vld [vmem:[#allocation8 + $0x3f0] sm:$0xff]
    %v795 = vld [vmem:[#allocation8 + $0x3f8] sm:$0xff]
    %v796 = vld [vmem:[#allocation8 + $0x400] sm:$0xff]
    %v797 = vld [vmem:[#allocation8 + $0x408] sm:$0xff]
    %v798 = vld [vmem:[#allocation8 + $0x410] sm:$0xff]
    %v799 = vld [vmem:[#allocation8 + $0x418] sm:$0xff]
    %v800 = vld [vmem:[#allocation8 + $0x420] sm:$0xff]
    %v801 = vld [vmem:[#allocation8 + $0x428] sm:$0xff]
    %v802 = vld [vmem:[#allocation8 + $0x430] sm:$0xff]
    %v803 = vld [vmem:[#allocation8 + $0x438] sm:$0xff]
    %v804 = vld [vmem:[#allocation8 + $0x440] sm:$0xff]
    %v805 = vld [vmem:[#allocation8 + $0x448] sm:$0xff]
    %v806 = vld [vmem:[#allocation8 + $0x450] sm:$0xff]
    %v807 = vld [vmem:[#allocation8 + $0x458] sm:$0xff]
    %v808 = vld [vmem:[#allocation8 + $0x460] sm:$0xff]
    %v809 = vld [vmem:[#allocation8 + $0x468] sm:$0xff]
    %v810 = vld [vmem:[#allocation8 + $0x470] sm:$0xff]
    %v811 = vld [vmem:[#allocation8 + $0x478] sm:$0xff]
    %v812 = vld [vmem:[#allocation8 + $0x480] sm:$0xff]
    %v813 = vld [vmem:[#allocation8 + $0x488] sm:$0xff]
    %v814 = vld [vmem:[#allocation8 + $0x490] sm:$0xff]
    %v815 = vld [vmem:[#allocation8 + $0x498] sm:$0xff]
    %v816 = vld [vmem:[#allocation8 + $0x4a0] sm:$0xff]
    %v817 = vld [vmem:[#allocation8 + $0x4a8] sm:$0xff]
    %v818 = vld [vmem:[#allocation8 + $0x4b0] sm:$0xff]
    %v819 = vld [vmem:[#allocation8 + $0x4b8] sm:$0xff]
    %v820 = vld [vmem:[#allocation8 + $0x4c0] sm:$0xff]
    %v821 = vld [vmem:[#allocation8 + $0x4c8] sm:$0xff]
    %v822 = vld [vmem:[#allocation8 + $0x4d0] sm:$0xff]
    %v823 = vld [vmem:[#allocation8 + $0x4d8] sm:$0xff]
    %v824 = vld [vmem:[#allocation8 + $0x4e0] sm:$0xff]
    %v825 = vld [vmem:[#allocation8 + $0x4e8] sm:$0xff]
    %v826 = vld [vmem:[#allocation8 + $0x4f0] sm:$0xff]
    %v827 = vld [vmem:[#allocation8 + $0x4f8] sm:$0xff]
    %v828 = vld [vmem:[#allocation8 + $0x500] sm:$0xff]
    %v829 = vld [vmem:[#allocation8 + $0x508] sm:$0xff]
    %v830 = vld [vmem:[#allocation8 + $0x510] sm:$0xff]
    %v831 = vld [vmem:[#allocation8 + $0x518] sm:$0xff]
    %v832 = vld [vmem:[#allocation8 + $0x520] sm:$0xff]
    %v833 = vld [vmem:[#allocation8 + $0x528] sm:$0xff]
    %v834 = vld [vmem:[#allocation8 + $0x530] sm:$0xff]
    %v835 = vld [vmem:[#allocation8 + $0x538] sm:$0xff]
    %v836 = vld [vmem:[#allocation8 + $0x540] sm:$0xff]
    %v837 = vld [vmem:[#allocation8 + $0x548] sm:$0xff]
    %v838 = vld [vmem:[#allocation8 + $0x550] sm:$0xff]
    %v839 = vld [vmem:[#allocation8 + $0x558] sm:$0xff]
    %v840 = vld [vmem:[#allocation8 + $0x560] sm:$0xff]
    %v841 = vld [vmem:[#allocation8 + $0x568] sm:$0xff]
    %v842 = vld [vmem:[#allocation8 + $0x570] sm:$0xff]
    %v843 = vld [vmem:[#allocation8 + $0x578] sm:$0xff]
    %v844 = vld [vmem:[#allocation8 + $0x580] sm:$0xff]
    %v845 = vld [vmem:[#allocation8 + $0x588] sm:$0xff]
    %v846 = vld [vmem:[#allocation8 + $0x590] sm:$0xff]
    %v847 = vld [vmem:[#allocation8 + $0x598] sm:$0xff]
    %v848 = vld [vmem:[#allocation8 + $0x5a0] sm:$0xff]
    %v849 = vld [vmem:[#allocation8 + $0x5a8] sm:$0xff]
    %v850 = vld [vmem:[#allocation8 + $0x5b0] sm:$0xff]
    %v851 = vld [vmem:[#allocation8 + $0x5b8] sm:$0xff]
    %v852 = vld [vmem:[#allocation8 + $0x5c0] sm:$0xff]
    %v853 = vld [vmem:[#allocation8 + $0x5c8] sm:$0xff]
    %v854 = vld [vmem:[#allocation8 + $0x5d0] sm:$0xff]
    %v855 = vld [vmem:[#allocation8 + $0x5d8] sm:$0xff]
    %v856 = vld [vmem:[#allocation8 + $0x5e0] sm:$0xff]
    %v857 = vld [vmem:[#allocation8 + $0x5e8] sm:$0xff]
    %v858 = vld [vmem:[#allocation8 + $0x5f0] sm:$0xff]
    %v859 = vld [vmem:[#allocation8 + $0x5f8] sm:$0xff]
    %v860 = vld [vmem:[#allocation8 + $0x600] sm:$0xff]
    %v861 = vld [vmem:[#allocation8 + $0x608] sm:$0xff]
    %v862 = vld [vmem:[#allocation8 + $0x610] sm:$0xff]
    %v863 = vld [vmem:[#allocation8 + $0x618] sm:$0xff]
    %v864 = vld [vmem:[#allocation8 + $0x620] sm:$0xff]
    %v865 = vld [vmem:[#allocation8 + $0x628] sm:$0xff]
    %v866 = vld [vmem:[#allocation8 + $0x630] sm:$0xff]
    %v867 = vld [vmem:[#allocation8 + $0x638] sm:$0xff]
    %v868 = vld [vmem:[#allocation8 + $0x640] sm:$0xff]
    %v869 = vld [vmem:[#allocation8 + $0x648] sm:$0xff]
    %v870 = vld [vmem:[#allocation8 + $0x650] sm:$0xff]
    %v871 = vld [vmem:[#allocation8 + $0x658] sm:$0xff]
    %v872 = vld [vmem:[#allocation8 + $0x660] sm:$0xff]
    %v873 = vld [vmem:[#allocation8 + $0x668] sm:$0xff]
    %v874 = vld [vmem:[#allocation8 + $0x670] sm:$0xff]
    %v875 = vld [vmem:[#allocation8 + $0x678] sm:$0xff]
    %v876 = vld [vmem:[#allocation8 + $0x680] sm:$0xff]
    %v877 = vld [vmem:[#allocation8 + $0x688] sm:$0xff]
    %v878 = vld [vmem:[#allocation8 + $0x690] sm:$0xff]
    %v879 = vld [vmem:[#allocation8 + $0x698] sm:$0xff]
    %v880 = vld [vmem:[#allocation8 + $0x6a0] sm:$0xff]
    %v881 = vld [vmem:[#allocation8 + $0x6a8] sm:$0xff]
    %v882 = vld [vmem:[#allocation8 + $0x6b0] sm:$0xff]
    %v883 = vld [vmem:[#allocation8 + $0x6b8] sm:$0xff]
    %v884 = vld [vmem:[#allocation8 + $0x6c0] sm:$0xff]
    %v885 = vld [vmem:[#allocation8 + $0x6c8] sm:$0xff]
    %v886 = vld [vmem:[#allocation8 + $0x6d0] sm:$0xff]
    %v887 = vld [vmem:[#allocation8 + $0x6d8] sm:$0xff]
    %v888 = vld [vmem:[#allocation8 + $0x6e0] sm:$0xff]
    %v889 = vld [vmem:[#allocation8 + $0x6e8] sm:$0xff]
    %v890 = vld [vmem:[#allocation8 + $0x6f0] sm:$0xff]
    %v891 = vld [vmem:[#allocation8 + $0x6f8] sm:$0xff]
    %v892 = vld [vmem:[#allocation8 + $0x700] sm:$0xff]
    %v893 = vld [vmem:[#allocation8 + $0x708] sm:$0xff]
    %v894 = vld [vmem:[#allocation8 + $0x710] sm:$0xff]
    %v895 = vld [vmem:[#allocation8 + $0x718] sm:$0xff]
    %v896 = vld [vmem:[#allocation8 + $0x720] sm:$0xff]
    %v897 = vld [vmem:[#allocation8 + $0x728] sm:$0xff]
    %v898 = vld [vmem:[#allocation8 + $0x730] sm:$0xff]
    %v899 = vld [vmem:[#allocation8 + $0x738] sm:$0xff]
    %v900 = vld [vmem:[#allocation8 + $0x740] sm:$0xff]
    %v901 = vld [vmem:[#allocation8 + $0x748] sm:$0xff]
    %v902 = vld [vmem:[#allocation8 + $0x750] sm:$0xff]
    %v903 = vld [vmem:[#allocation8 + $0x758] sm:$0xff]
    %v904 = vld [vmem:[#allocation8 + $0x760] sm:$0xff]
    %v905 = vld [vmem:[#allocation8 + $0x768] sm:$0xff]
    %v906 = vld [vmem:[#allocation8 + $0x770] sm:$0xff]
    %v907 = vld [vmem:[#allocation8 + $0x778] sm:$0xff]
    %v908 = vld [vmem:[#allocation8 + $0x780] sm:$0xff]
    %v909 = vld [vmem:[#allocation8 + $0x788] sm:$0xff]
    %v910 = vld [vmem:[#allocation8 + $0x790] sm:$0xff]
    %v911 = vld [vmem:[#allocation8 + $0x798] sm:$0xff]
    %v912 = vld [vmem:[#allocation8 + $0x7a0] sm:$0xff]
    %v913 = vld [vmem:[#allocation8 + $0x7a8] sm:$0xff]
    %v914 = vld [vmem:[#allocation8 + $0x7b0] sm:$0xff]
    %v915 = vld [vmem:[#allocation8 + $0x7b8] sm:$0xff]
    %v916 = vld [vmem:[#allocation8 + $0x7c0] sm:$0xff]
    %v917 = vld [vmem:[#allocation8 + $0x7c8] sm:$0xff]
    %v918 = vld [vmem:[#allocation8 + $0x7d0] sm:$0xff]
    %v919 = vld [vmem:[#allocation8 + $0x7d8] sm:$0xff]
    %v920 = vld [vmem:[#allocation8 + $0x7e0] sm:$0xff]
    %v921 = vld [vmem:[#allocation8 + $0x7e8] sm:$0xff]
    %v922 = vld [vmem:[#allocation8 + $0x7f0] sm:$0xff]
    %v923 = vld [vmem:[#allocation8 + $0x7f8] sm:$0xff]
    %v924 = vld [vmem:[%s5] sm:$0xf]
    %v926 = vlaneseq
    %v927 = vshrl.u32 %v926, 7
    %v928 = vsub.s32 0, %v927
    %v929 = vrot.slane %v924, %v928
    %v930 = vlaneseq
    %v931 = vshrl.u32 %v930, 7
    %v932 = vsub.s32 1, %v931
    %v933 = vrot.slane %v924, %v932
    %v934 = vlaneseq
    %v935 = vshrl.u32 %v934, 7
    %v936 = vsub.s32 2, %v935
    %v937 = vrot.slane %v924, %v936
    %v938 = vlaneseq
    %v939 = vshrl.u32 %v938, 7
    %v940 = vsub.s32 3, %v939
    %v941 = vrot.slane %v924, %v940
    %946 = vmatprep.subr.mxu0 %v669
    %947 = vmatpush1.msra.mxu0 %v668
    %948 = vmatprep.subr.mxu0 %v673
    %949 = vmatpush1.msra.mxu0 %v672
    %950 = vmatprep.subr.mxu0 %v677
    %951 = vmatpush1.msra.mxu0 %v676
    %952 = vmatprep.subr.mxu0 %v681
    %953 = vmatpush1.msra.mxu0 %v680
    %954 = vmatprep.subr.mxu0 %v685
    %955 = vmatpush1.msra.mxu0 %v684
    %956 = vmatprep.subr.mxu0 %v689
    %957 = vmatpush1.msra.mxu0 %v688
    %958 = vmatprep.subr.mxu0 %v693
    %959 = vmatpush1.msra.mxu0 %v692
    %960 = vmatprep.subr.mxu0 %v697
    %961 = vmatpush1.msra.mxu0 %v696
    %962 = vmatprep.subr.mxu0 %v701
    %963 = vmatpush1.msra.mxu0 %v700
    %964 = vmatprep.subr.mxu0 %v705
    %965 = vmatpush1.msra.mxu0 %v704
    %966 = vmatprep.subr.mxu0 %v709
    %967 = vmatpush1.msra.mxu0 %v708
    %968 = vmatprep.subr.mxu0 %v713
    %969 = vmatpush1.msra.mxu0 %v712
    %970 = vmatprep.subr.mxu0 %v717
    %971 = vmatpush1.msra.mxu0 %v716
    %972 = vmatprep.subr.mxu0 %v721
    %973 = vmatpush1.msra.mxu0 %v720
    %974 = vmatprep.subr.mxu0 %v725
    %975 = vmatpush1.msra.mxu0 %v724
    %976 = vmatprep.subr.mxu0 %v729
    %977 = vmatpush1.msra.mxu0 %v728
    %978 = vmatprep.subr.mxu0 %v733
    %979 = vmatpush1.msra.mxu0 %v732
    %980 = vmatprep.subr.mxu0 %v737
    %981 = vmatpush1.msra.mxu0 %v736
    %982 = vmatprep.subr.mxu0 %v741
    %983 = vmatpush1.msra.mxu0 %v740
    %984 = vmatprep.subr.mxu0 %v745
    %985 = vmatpush1.msra.mxu0 %v744
    %986 = vmatprep.subr.mxu0 %v749
    %987 = vmatpush1.msra.mxu0 %v748
    %988 = vmatprep.subr.mxu0 %v753
    %989 = vmatpush1.msra.mxu0 %v752
    %990 = vmatprep.subr.mxu0 %v757
    %991 = vmatpush1.msra.mxu0 %v756
    %992 = vmatprep.subr.mxu0 %v761
    %993 = vmatpush1.msra.mxu0 %v760
    %994 = vmatprep.subr.mxu0 %v765
    %995 = vmatpush1.msra.mxu0 %v764
    %996 = vmatprep.subr.mxu0 %v769
    %997 = vmatpush1.msra.mxu0 %v768
    %998 = vmatprep.subr.mxu0 %v773
    %999 = vmatpush1.msra.mxu0 %v772
    %1000 = vmatprep.subr.mxu0 %v777
    %1001 = vmatpush1.msra.mxu0 %v776
    %1002 = vmatprep.subr.mxu0 %v781
    %1003 = vmatpush1.msra.mxu0 %v780
    %1004 = vmatprep.subr.mxu0 %v785
    %1005 = vmatpush1.msra.mxu0 %v784
    %1006 = vmatprep.subr.mxu0 %v789
    %1007 = vmatpush1.msra.mxu0 %v788
    %1008 = vmatprep.subr.mxu0 %v793
    %1009 = vmatpush1.msra.mxu0 %v792
    %1010 = vmatprep.mubr.f32.mxu0 %v99
    %1011 = vmatmul.mubr.f32.gmra.mrb[0].mxu0 %v98
    %v1012 = vpop.f32.mrb[0].mxu0
    %v1013 = vadd.f32 %v929, %v1012
    %v1014 = vpop.f32.mrb[0].mxu0
    %v1015 = vadd.f32 %v933, %v1014
    %1016 = vdwg.mxu0
    %1017 = vmatprep.subr.mxu0 %v797
    %1018 = vmatpush1.msra.mxu0 %v796
    %1019 = vmatprep.subr.mxu0 %v801
    %1020 = vmatpush1.msra.mxu0 %v800
    %1021 = vmatprep.subr.mxu0 %v805
    %1022 = vmatpush1.msra.mxu0 %v804
    %1023 = vmatprep.subr.mxu0 %v809
    %1024 = vmatpush1.msra.mxu0 %v808
    %1025 = vmatprep.subr.mxu0 %v813
    %1026 = vmatpush1.msra.mxu0 %v812
    %1027 = vmatprep.subr.mxu0 %v817
    %1028 = vmatpush1.msra.mxu0 %v816
    %1029 = vmatprep.subr.mxu0 %v821
    %1030 = vmatpush1.msra.mxu0 %v820
    %1031 = vmatprep.subr.mxu0 %v825
    %1032 = vmatpush1.msra.mxu0 %v824
    %1033 = vmatprep.subr.mxu0 %v829
    %1034 = vmatpush1.msra.mxu0 %v828
    %1035 = vmatprep.subr.mxu0 %v833
    %1036 = vmatpush1.msra.mxu0 %v832
    %1037 = vmatprep.subr.mxu0 %v837
    %1038 = vmatpush1.msra.mxu0 %v836
    %1039 = vmatprep.subr.mxu0 %v841
    %1040 = vmatpush1.msra.mxu0 %v840
    %1041 = vmatprep.subr.mxu0 %v845
    %1042 = vmatpush1.msra.mxu0 %v844
    %1043 = vmatprep.subr.mxu0 %v849
    %1044 = vmatpush1.msra.mxu0 %v848
    %1045 = vmatprep.subr.mxu0 %v853
    %1046 = vmatpush1.msra.mxu0 %v852
    %1047 = vmatprep.subr.mxu0 %v857
    %1048 = vmatpush1.msra.mxu0 %v856
    %1049 = vmatprep.subr.mxu0 %v861
    %1050 = vmatpush1.msra.mxu0 %v860
    %1051 = vmatprep.subr.mxu0 %v865
    %1052 = vmatpush1.msra.mxu0 %v864
    %1053 = vmatprep.subr.mxu0 %v869
    %1054 = vmatpush1.msra.mxu0 %v868
    %1055 = vmatprep.subr.mxu0 %v873
    %1056 = vmatpush1.msra.mxu0 %v872
    %1057 = vmatprep.subr.mxu0 %v877
    %1058 = vmatpush1.msra.mxu0 %v876
    %1059 = vmatprep.subr.mxu0 %v881
    %1060 = vmatpush1.msra.mxu0 %v880
    %1061 = vmatprep.subr.mxu0 %v885
    %1062 = vmatpush1.msra.mxu0 %v884
    %1063 = vmatprep.subr.mxu0 %v889
    %1064 = vmatpush1.msra.mxu0 %v888
    %1065 = vmatprep.subr.mxu0 %v893
    %1066 = vmatpush1.msra.mxu0 %v892
    %1067 = vmatprep.subr.mxu0 %v897
    %1068 = vmatpush1.msra.mxu0 %v896
    %1069 = vmatprep.subr.mxu0 %v901
    %1070 = vmatpush1.msra.mxu0 %v900
    %1071 = vmatprep.subr.mxu0 %v905
    %1072 = vmatpush1.msra.mxu0 %v904
    %1073 = vmatprep.subr.mxu0 %v909
    %1074 = vmatpush1.msra.mxu0 %v908
    %1075 = vmatprep.subr.mxu0 %v913
    %1076 = vmatpush1.msra.mxu0 %v912
    %1077 = vmatprep.subr.mxu0 %v917
    %1078 = vmatpush1.msra.mxu0 %v916
    %1079 = vmatprep.subr.mxu0 %v921
    %1080 = vmatpush1.msra.mxu0 %v920
    %1081 = vmatprep.mubr.f32.mxu0 %v101
    %1082 = vmatmul.mubr.f32.gmra.mrb[0].mxu0 %v100
    %v1083 = vpop.f32.mrb[0].mxu0
    %v1084 = vadd.f32 %v1013, %v1083
    %v1085 = vpop.f32.mrb[0].mxu0
    %v1086 = vadd.f32 %v1015, %v1085
    %1087 = vdwg.mxu0
    %1088 = vmatprep.subr.mxu0 %v671
    %1089 = vmatpush1.msra.mxu0 %v670
    %1090 = vmatprep.subr.mxu0 %v675
    %1091 = vmatpush1.msra.mxu0 %v674
    %1092 = vmatprep.subr.mxu0 %v679
    %1093 = vmatpush1.msra.mxu0 %v678
    %1094 = vmatprep.subr.mxu0 %v683
    %1095 = vmatpush1.msra.mxu0 %v682
    %1096 = vmatprep.subr.mxu0 %v687
    %1097 = vmatpush1.msra.mxu0 %v686
    %1098 = vmatprep.subr.mxu0 %v691
    %1099 = vmatpush1.msra.mxu0 %v690
    %1100 = vmatprep.subr.mxu0 %v695
    %1101 = vmatpush1.msra.mxu0 %v694
    %1102 = vmatprep.subr.mxu0 %v699
    %1103 = vmatpush1.msra.mxu0 %v698
    %1104 = vmatprep.subr.mxu0 %v703
    %1105 = vmatpush1.msra.mxu0 %v702
    %1106 = vmatprep.subr.mxu0 %v707
    %1107 = vmatpush1.msra.mxu0 %v706
    %1108 = vmatprep.subr.mxu0 %v711
    %1109 = vmatpush1.msra.mxu0 %v710
    %1110 = vmatprep.subr.mxu0 %v715
    %1111 = vmatpush1.msra.mxu0 %v714
    %1112 = vmatprep.subr.mxu0 %v719
    %1113 = vmatpush1.msra.mxu0 %v718
    %1114 = vmatprep.subr.mxu0 %v723
    %1115 = vmatpush1.msra.mxu0 %v722
    %1116 = vmatprep.subr.mxu0 %v727
    %1117 = vmatpush1.msra.mxu0 %v726
    %1118 = vmatprep.subr.mxu0 %v731
    %1119 = vmatpush1.msra.mxu0 %v730
    %1120 = vmatprep.subr.mxu0 %v735
    %1121 = vmatpush1.msra.mxu0 %v734
    %1122 = vmatprep.subr.mxu0 %v739
    %1123 = vmatpush1.msra.mxu0 %v738
    %1124 = vmatprep.subr.mxu0 %v743
    %1125 = vmatpush1.msra.mxu0 %v742
    %1126 = vmatprep.subr.mxu0 %v747
    %1127 = vmatpush1.msra.mxu0 %v746
    %1128 = vmatprep.subr.mxu0 %v751
    %1129 = vmatpush1.msra.mxu0 %v750
    %1130 = vmatprep.subr.mxu0 %v755
    %1131 = vmatpush1.msra.mxu0 %v754
    %1132 = vmatprep.subr.mxu0 %v759
    %1133 = vmatpush1.msra.mxu0 %v758
    %1134 = vmatprep.subr.mxu0 %v763
    %1135 = vmatpush1.msra.mxu0 %v762
    %1136 = vmatprep.subr.mxu0 %v767
    %1137 = vmatpush1.msra.mxu0 %v766
    %1138 = vmatprep.subr.mxu0 %v771
    %1139 = vmatpush1.msra.mxu0 %v770
    %1140 = vmatprep.subr.mxu0 %v775
    %1141 = vmatpush1.msra.mxu0 %v774
    %1142 = vmatprep.subr.mxu0 %v779
    %1143 = vmatpush1.msra.mxu0 %v778
    %1144 = vmatprep.subr.mxu0 %v783
    %1145 = vmatpush1.msra.mxu0 %v782
    %1146 = vmatprep.subr.mxu0 %v787
    %1147 = vmatpush1.msra.mxu0 %v786
    %1148 = vmatprep.subr.mxu0 %v791
    %1149 = vmatpush1.msra.mxu0 %v790
    %1150 = vmatprep.subr.mxu0 %v795
    %1151 = vmatpush1.msra.mxu0 %v794
    %1152 = vmatprep.mubr.f32.mxu0 %v99
    %1153 = vmatmul.mubr.f32.gmra.mrb[0].mxu0 %v98
    %v1154 = vpop.f32.mrb[0].mxu0
    %v1155 = vadd.f32 %v937, %v1154
    %v1156 = vpop.f32.mrb[0].mxu0
    %v1157 = vadd.f32 %v941, %v1156
    %1158 = vdwg.mxu0
    %1159 = vmatprep.subr.mxu0 %v799
    %1160 = vmatpush1.msra.mxu0 %v798
    %1161 = vmatprep.subr.mxu0 %v803
    %1162 = vmatpush1.msra.mxu0 %v802
    %1163 = vmatprep.subr.mxu0 %v807
    %1164 = vmatpush1.msra.mxu0 %v806
    %1165 = vmatprep.subr.mxu0 %v811
    %1166 = vmatpush1.msra.mxu0 %v810
    %1167 = vmatprep.subr.mxu0 %v815
    %1168 = vmatpush1.msra.mxu0 %v814
    %1169 = vmatprep.subr.mxu0 %v819
    %1170 = vmatpush1.msra.mxu0 %v818
    %1171 = vmatprep.subr.mxu0 %v823
    %1172 = vmatpush1.msra.mxu0 %v822
    %1173 = vmatprep.subr.mxu0 %v827
    %1174 = vmatpush1.msra.mxu0 %v826
    %1175 = vmatprep.subr.mxu0 %v831
    %1176 = vmatpush1.msra.mxu0 %v830
    %1177 = vmatprep.subr.mxu0 %v835
    %1178 = vmatpush1.msra.mxu0 %v834
    %1179 = vmatprep.subr.mxu0 %v839
    %1180 = vmatpush1.msra.mxu0 %v838
    %1181 = vmatprep.subr.mxu0 %v843
    %1182 = vmatpush1.msra.mxu0 %v842
    %1183 = vmatprep.subr.mxu0 %v847
    %1184 = vmatpush1.msra.mxu0 %v846
    %1185 = vmatprep.subr.mxu0 %v851
    %1186 = vmatpush1.msra.mxu0 %v850
    %1187 = vmatprep.subr.mxu0 %v855
    %1188 = vmatpush1.msra.mxu0 %v854
    %1189 = vmatprep.subr.mxu0 %v859
    %1190 = vmatpush1.msra.mxu0 %v858
    %1191 = vmatprep.subr.mxu0 %v863
    %1192 = vmatpush1.msra.mxu0 %v862
    %1193 = vmatprep.subr.mxu0 %v867
    %1194 = vmatpush1.msra.mxu0 %v866
    %1195 = vmatprep.subr.mxu0 %v871
    %1196 = vmatpush1.msra.mxu0 %v870
    %1197 = vmatprep.subr.mxu0 %v875
    %1198 = vmatpush1.msra.mxu0 %v874
    %1199 = vmatprep.subr.mxu0 %v879
    %1200 = vmatpush1.msra.mxu0 %v878
    %1201 = vmatprep.subr.mxu0 %v883
    %1202 = vmatpush1.msra.mxu0 %v882
    %1203 = vmatprep.subr.mxu0 %v887
    %1204 = vmatpush1.msra.mxu0 %v886
    %1205 = vmatprep.subr.mxu0 %v891
    %1206 = vmatpush1.msra.mxu0 %v890
    %1207 = vmatprep.subr.mxu0 %v895
    %1208 = vmatpush1.msra.mxu0 %v894
    %1209 = vmatprep.subr.mxu0 %v899
    %1210 = vmatpush1.msra.mxu0 %v898
    %1211 = vmatprep.subr.mxu0 %v903
    %1212 = vmatpush1.msra.mxu0 %v902
    %1213 = vmatprep.subr.mxu0 %v907
    %1214 = vmatpush1.msra.mxu0 %v906
    %1215 = vmatprep.subr.mxu0 %v911
    %1216 = vmatpush1.msra.mxu0 %v910
    %1217 = vmatprep.subr.mxu0 %v915
    %1218 = vmatpush1.msra.mxu0 %v914
    %1219 = vmatprep.subr.mxu0 %v919
    %1220 = vmatpush1.msra.mxu0 %v918
    %1221 = vmatprep.subr.mxu0 %v923
    %1222 = vmatpush1.msra.mxu0 %v922
    %1223 = vmatprep.mubr.f32.mxu0 %v101
    %1224 = vmatmul.mubr.f32.gmra.mrb[0].mxu0 %v100
    %v1225 = vpop.f32.mrb[0].mxu0
    %v1226 = vadd.f32 %v1155, %v1225
    %v1227 = vpop.f32.mrb[0].mxu0
    %v1228 = vadd.f32 %v1157, %v1227
    %1229 = vdwg.mxu0
    %v1230 = vtanh.pop %v1084
    %v1231 = vtanh.pop %v1086
    %v1232 = vtanh.pop %v1226
    %v1233 = vtanh.pop %v1228
    %v1234 = vmul.f32 %v664, %v1230
    %v1235 = vmul.f32 %v665, %v1231
    %v1236 = vmul.f32 %v666, %v1232
    %v1237 = vmul.f32 %v667, %v1233
    %v1238 = vld [vmem:[#allocation10] sm:$0xff]
    %v1239 = vld [vmem:[#allocation10 + $0x8] sm:$0xff]
    %v1240 = vld [vmem:[#allocation10 + $0x10] sm:$0xff]
    %v1241 = vld [vmem:[#allocation10 + $0x18] sm:$0xff]
    %v1242 = vld [vmem:[#allocation10 + $0x20] sm:$0xff]
    %v1243 = vld [vmem:[#allocation10 + $0x28] sm:$0xff]
    %v1244 = vld [vmem:[#allocation10 + $0x30] sm:$0xff]
    %v1245 = vld [vmem:[#allocation10 + $0x38] sm:$0xff]
    %v1246 = vld [vmem:[#allocation10 + $0x40] sm:$0xff]
    %v1247 = vld [vmem:[#allocation10 + $0x48] sm:$0xff]
    %v1248 = vld [vmem:[#allocation10 + $0x50] sm:$0xff]
    %v1249 = vld [vmem:[#allocation10 + $0x58] sm:$0xff]
    %v1250 = vld [vmem:[#allocation10 + $0x60] sm:$0xff]
    %v1251 = vld [vmem:[#allocation10 + $0x68] sm:$0xff]
    %v1252 = vld [vmem:[#allocation10 + $0x70] sm:$0xff]
    %v1253 = vld [vmem:[#allocation10 + $0x78] sm:$0xff]
    %v1254 = vld [vmem:[#allocation10 + $0x80] sm:$0xff]
    %v1255 = vld [vmem:[#allocation10 + $0x88] sm:$0xff]
    %v1256 = vld [vmem:[#allocation10 + $0x90] sm:$0xff]
    %v1257 = vld [vmem:[#allocation10 + $0x98] sm:$0xff]
    %v1258 = vld [vmem:[#allocation10 + $0xa0] sm:$0xff]
    %v1259 = vld [vmem:[#allocation10 + $0xa8] sm:$0xff]
    %v1260 = vld [vmem:[#allocation10 + $0xb0] sm:$0xff]
    %v1261 = vld [vmem:[#allocation10 + $0xb8] sm:$0xff]
    %v1262 = vld [vmem:[#allocation10 + $0xc0] sm:$0xff]
    %v1263 = vld [vmem:[#allocation10 + $0xc8] sm:$0xff]
    %v1264 = vld [vmem:[#allocation10 + $0xd0] sm:$0xff]
    %v1265 = vld [vmem:[#allocation10 + $0xd8] sm:$0xff]
    %v1266 = vld [vmem:[#allocation10 + $0xe0] sm:$0xff]
    %v1267 = vld [vmem:[#allocation10 + $0xe8] sm:$0xff]
    %v1268 = vld [vmem:[#allocation10 + $0xf0] sm:$0xff]
    %v1269 = vld [vmem:[#allocation10 + $0xf8] sm:$0xff]
    %v1270 = vld [vmem:[#allocation10 + $0x100] sm:$0xff]
    %v1271 = vld [vmem:[#allocation10 + $0x108] sm:$0xff]
    %v1272 = vld [vmem:[#allocation10 + $0x110] sm:$0xff]
    %v1273 = vld [vmem:[#allocation10 + $0x118] sm:$0xff]
    %v1274 = vld [vmem:[#allocation10 + $0x120] sm:$0xff]
    %v1275 = vld [vmem:[#allocation10 + $0x128] sm:$0xff]
    %v1276 = vld [vmem:[#allocation10 + $0x130] sm:$0xff]
    %v1277 = vld [vmem:[#allocation10 + $0x138] sm:$0xff]
    %v1278 = vld [vmem:[#allocation10 + $0x140] sm:$0xff]
    %v1279 = vld [vmem:[#allocation10 + $0x148] sm:$0xff]
    %v1280 = vld [vmem:[#allocation10 + $0x150] sm:$0xff]
    %v1281 = vld [vmem:[#allocation10 + $0x158] sm:$0xff]
    %v1282 = vld [vmem:[#allocation10 + $0x160] sm:$0xff]
    %v1283 = vld [vmem:[#allocation10 + $0x168] sm:$0xff]
    %v1284 = vld [vmem:[#allocation10 + $0x170] sm:$0xff]
    %v1285 = vld [vmem:[#allocation10 + $0x178] sm:$0xff]
    %v1286 = vld [vmem:[#allocation10 + $0x180] sm:$0xff]
    %v1287 = vld [vmem:[#allocation10 + $0x188] sm:$0xff]
    %v1288 = vld [vmem:[#allocation10 + $0x190] sm:$0xff]
    %v1289 = vld [vmem:[#allocation10 + $0x198] sm:$0xff]
    %v1290 = vld [vmem:[#allocation10 + $0x1a0] sm:$0xff]
    %v1291 = vld [vmem:[#allocation10 + $0x1a8] sm:$0xff]
    %v1292 = vld [vmem:[#allocation10 + $0x1b0] sm:$0xff]
    %v1293 = vld [vmem:[#allocation10 + $0x1b8] sm:$0xff]
    %v1294 = vld [vmem:[#allocation10 + $0x1c0] sm:$0xff]
    %v1295 = vld [vmem:[#allocation10 + $0x1c8] sm:$0xff]
    %v1296 = vld [vmem:[#allocation10 + $0x1d0] sm:$0xff]
    %v1297 = vld [vmem:[#allocation10 + $0x1d8] sm:$0xff]
    %v1298 = vld [vmem:[#allocation10 + $0x1e0] sm:$0xff]
    %v1299 = vld [vmem:[#allocation10 + $0x1e8] sm:$0xff]
    %v1300 = vld [vmem:[#allocation10 + $0x1f0] sm:$0xff]
    %v1301 = vld [vmem:[#allocation10 + $0x1f8] sm:$0xff]
    %v1302 = vld [vmem:[#allocation10 + $0x200] sm:$0xff]
    %v1303 = vld [vmem:[#allocation10 + $0x208] sm:$0xff]
    %v1304 = vld [vmem:[#allocation10 + $0x210] sm:$0xff]
    %v1305 = vld [vmem:[#allocation10 + $0x218] sm:$0xff]
    %v1306 = vld [vmem:[#allocation10 + $0x220] sm:$0xff]
    %v1307 = vld [vmem:[#allocation10 + $0x228] sm:$0xff]
    %v1308 = vld [vmem:[#allocation10 + $0x230] sm:$0xff]
    %v1309 = vld [vmem:[#allocation10 + $0x238] sm:$0xff]
    %v1310 = vld [vmem:[#allocation10 + $0x240] sm:$0xff]
    %v1311 = vld [vmem:[#allocation10 + $0x248] sm:$0xff]
    %v1312 = vld [vmem:[#allocation10 + $0x250] sm:$0xff]
    %v1313 = vld [vmem:[#allocation10 + $0x258] sm:$0xff]
    %v1314 = vld [vmem:[#allocation10 + $0x260] sm:$0xff]
    %v1315 = vld [vmem:[#allocation10 + $0x268] sm:$0xff]
    %v1316 = vld [vmem:[#allocation10 + $0x270] sm:$0xff]
    %v1317 = vld [vmem:[#allocation10 + $0x278] sm:$0xff]
    %v1318 = vld [vmem:[#allocation10 + $0x280] sm:$0xff]
    %v1319 = vld [vmem:[#allocation10 + $0x288] sm:$0xff]
    %v1320 = vld [vmem:[#allocation10 + $0x290] sm:$0xff]
    %v1321 = vld [vmem:[#allocation10 + $0x298] sm:$0xff]
    %v1322 = vld [vmem:[#allocation10 + $0x2a0] sm:$0xff]
    %v1323 = vld [vmem:[#allocation10 + $0x2a8] sm:$0xff]
    %v1324 = vld [vmem:[#allocation10 + $0x2b0] sm:$0xff]
    %v1325 = vld [vmem:[#allocation10 + $0x2b8] sm:$0xff]
    %v1326 = vld [vmem:[#allocation10 + $0x2c0] sm:$0xff]
    %v1327 = vld [vmem:[#allocation10 + $0x2c8] sm:$0xff]
    %v1328 = vld [vmem:[#allocation10 + $0x2d0] sm:$0xff]
    %v1329 = vld [vmem:[#allocation10 + $0x2d8] sm:$0xff]
    %v1330 = vld [vmem:[#allocation10 + $0x2e0] sm:$0xff]
    %v1331 = vld [vmem:[#allocation10 + $0x2e8] sm:$0xff]
    %v1332 = vld [vmem:[#allocation10 + $0x2f0] sm:$0xff]
    %v1333 = vld [vmem:[#allocation10 + $0x2f8] sm:$0xff]
    %v1334 = vld [vmem:[#allocation10 + $0x300] sm:$0xff]
    %v1335 = vld [vmem:[#allocation10 + $0x308] sm:$0xff]
    %v1336 = vld [vmem:[#allocation10 + $0x310] sm:$0xff]
    %v1337 = vld [vmem:[#allocation10 + $0x318] sm:$0xff]
    %v1338 = vld [vmem:[#allocation10 + $0x320] sm:$0xff]
    %v1339 = vld [vmem:[#allocation10 + $0x328] sm:$0xff]
    %v1340 = vld [vmem:[#allocation10 + $0x330] sm:$0xff]
    %v1341 = vld [vmem:[#allocation10 + $0x338] sm:$0xff]
    %v1342 = vld [vmem:[#allocation10 + $0x340] sm:$0xff]
    %v1343 = vld [vmem:[#allocation10 + $0x348] sm:$0xff]
    %v1344 = vld [vmem:[#allocation10 + $0x350] sm:$0xff]
    %v1345 = vld [vmem:[#allocation10 + $0x358] sm:$0xff]
    %v1346 = vld [vmem:[#allocation10 + $0x360] sm:$0xff]
    %v1347 = vld [vmem:[#allocation10 + $0x368] sm:$0xff]
    %v1348 = vld [vmem:[#allocation10 + $0x370] sm:$0xff]
    %v1349 = vld [vmem:[#allocation10 + $0x378] sm:$0xff]
    %v1350 = vld [vmem:[#allocation10 + $0x380] sm:$0xff]
    %v1351 = vld [vmem:[#allocation10 + $0x388] sm:$0xff]
    %v1352 = vld [vmem:[#allocation10 + $0x390] sm:$0xff]
    %v1353 = vld [vmem:[#allocation10 + $0x398] sm:$0xff]
    %v1354 = vld [vmem:[#allocation10 + $0x3a0] sm:$0xff]
    %v1355 = vld [vmem:[#allocation10 + $0x3a8] sm:$0xff]
    %v1356 = vld [vmem:[#allocation10 + $0x3b0] sm:$0xff]
    %v1357 = vld [vmem:[#allocation10 + $0x3b8] sm:$0xff]
    %v1358 = vld [vmem:[#allocation10 + $0x3c0] sm:$0xff]
    %v1359 = vld [vmem:[#allocation10 + $0x3c8] sm:$0xff]
    %v1360 = vld [vmem:[#allocation10 + $0x3d0] sm:$0xff]
    %v1361 = vld [vmem:[#allocation10 + $0x3d8] sm:$0xff]
    %v1362 = vld [vmem:[#allocation10 + $0x3e0] sm:$0xff]
    %v1363 = vld [vmem:[#allocation10 + $0x3e8] sm:$0xff]
    %v1364 = vld [vmem:[#allocation10 + $0x3f0] sm:$0xff]
    %v1365 = vld [vmem:[#allocation10 + $0x3f8] sm:$0xff]
    %v1366 = vld [vmem:[#allocation10 + $0x400] sm:$0xff]
    %v1367 = vld [vmem:[#allocation10 + $0x408] sm:$0xff]
    %v1368 = vld [vmem:[#allocation10 + $0x410] sm:$0xff]
    %v1369 = vld [vmem:[#allocation10 + $0x418] sm:$0xff]
    %v1370 = vld [vmem:[#allocation10 + $0x420] sm:$0xff]
    %v1371 = vld [vmem:[#allocation10 + $0x428] sm:$0xff]
    %v1372 = vld [vmem:[#allocation10 + $0x430] sm:$0xff]
    %v1373 = vld [vmem:[#allocation10 + $0x438] sm:$0xff]
    %v1374 = vld [vmem:[#allocation10 + $0x440] sm:$0xff]
    %v1375 = vld [vmem:[#allocation10 + $0x448] sm:$0xff]
    %v1376 = vld [vmem:[#allocation10 + $0x450] sm:$0xff]
    %v1377 = vld [vmem:[#allocation10 + $0x458] sm:$0xff]
    %v1378 = vld [vmem:[#allocation10 + $0x460] sm:$0xff]
    %v1379 = vld [vmem:[#allocation10 + $0x468] sm:$0xff]
    %v1380 = vld [vmem:[#allocation10 + $0x470] sm:$0xff]
    %v1381 = vld [vmem:[#allocation10 + $0x478] sm:$0xff]
    %v1382 = vld [vmem:[#allocation10 + $0x480] sm:$0xff]
    %v1383 = vld [vmem:[#allocation10 + $0x488] sm:$0xff]
    %v1384 = vld [vmem:[#allocation10 + $0x490] sm:$0xff]
    %v1385 = vld [vmem:[#allocation10 + $0x498] sm:$0xff]
    %v1386 = vld [vmem:[#allocation10 + $0x4a0] sm:$0xff]
    %v1387 = vld [vmem:[#allocation10 + $0x4a8] sm:$0xff]
    %v1388 = vld [vmem:[#allocation10 + $0x4b0] sm:$0xff]
    %v1389 = vld [vmem:[#allocation10 + $0x4b8] sm:$0xff]
    %v1390 = vld [vmem:[#allocation10 + $0x4c0] sm:$0xff]
    %v1391 = vld [vmem:[#allocation10 + $0x4c8] sm:$0xff]
    %v1392 = vld [vmem:[#allocation10 + $0x4d0] sm:$0xff]
    %v1393 = vld [vmem:[#allocation10 + $0x4d8] sm:$0xff]
    %v1394 = vld [vmem:[#allocation10 + $0x4e0] sm:$0xff]
    %v1395 = vld [vmem:[#allocation10 + $0x4e8] sm:$0xff]
    %v1396 = vld [vmem:[#allocation10 + $0x4f0] sm:$0xff]
    %v1397 = vld [vmem:[#allocation10 + $0x4f8] sm:$0xff]
    %v1398 = vld [vmem:[#allocation10 + $0x500] sm:$0xff]
    %v1399 = vld [vmem:[#allocation10 + $0x508] sm:$0xff]
    %v1400 = vld [vmem:[#allocation10 + $0x510] sm:$0xff]
    %v1401 = vld [vmem:[#allocation10 + $0x518] sm:$0xff]
    %v1402 = vld [vmem:[#allocation10 + $0x520] sm:$0xff]
    %v1403 = vld [vmem:[#allocation10 + $0x528] sm:$0xff]
    %v1404 = vld [vmem:[#allocation10 + $0x530] sm:$0xff]
    %v1405 = vld [vmem:[#allocation10 + $0x538] sm:$0xff]
    %v1406 = vld [vmem:[#allocation10 + $0x540] sm:$0xff]
    %v1407 = vld [vmem:[#allocation10 + $0x548] sm:$0xff]
    %v1408 = vld [vmem:[#allocation10 + $0x550] sm:$0xff]
    %v1409 = vld [vmem:[#allocation10 + $0x558] sm:$0xff]
    %v1410 = vld [vmem:[#allocation10 + $0x560] sm:$0xff]
    %v1411 = vld [vmem:[#allocation10 + $0x568] sm:$0xff]
    %v1412 = vld [vmem:[#allocation10 + $0x570] sm:$0xff]
    %v1413 = vld [vmem:[#allocation10 + $0x578] sm:$0xff]
    %v1414 = vld [vmem:[#allocation10 + $0x580] sm:$0xff]
    %v1415 = vld [vmem:[#allocation10 + $0x588] sm:$0xff]
    %v1416 = vld [vmem:[#allocation10 + $0x590] sm:$0xff]
    %v1417 = vld [vmem:[#allocation10 + $0x598] sm:$0xff]
    %v1418 = vld [vmem:[#allocation10 + $0x5a0] sm:$0xff]
    %v1419 = vld [vmem:[#allocation10 + $0x5a8] sm:$0xff]
    %v1420 = vld [vmem:[#allocation10 + $0x5b0] sm:$0xff]
    %v1421 = vld [vmem:[#allocation10 + $0x5b8] sm:$0xff]
    %v1422 = vld [vmem:[#allocation10 + $0x5c0] sm:$0xff]
    %v1423 = vld [vmem:[#allocation10 + $0x5c8] sm:$0xff]
    %v1424 = vld [vmem:[#allocation10 + $0x5d0] sm:$0xff]
    %v1425 = vld [vmem:[#allocation10 + $0x5d8] sm:$0xff]
    %v1426 = vld [vmem:[#allocation10 + $0x5e0] sm:$0xff]
    %v1427 = vld [vmem:[#allocation10 + $0x5e8] sm:$0xff]
    %v1428 = vld [vmem:[#allocation10 + $0x5f0] sm:$0xff]
    %v1429 = vld [vmem:[#allocation10 + $0x5f8] sm:$0xff]
    %v1430 = vld [vmem:[#allocation10 + $0x600] sm:$0xff]
    %v1431 = vld [vmem:[#allocation10 + $0x608] sm:$0xff]
    %v1432 = vld [vmem:[#allocation10 + $0x610] sm:$0xff]
    %v1433 = vld [vmem:[#allocation10 + $0x618] sm:$0xff]
    %v1434 = vld [vmem:[#allocation10 + $0x620] sm:$0xff]
    %v1435 = vld [vmem:[#allocation10 + $0x628] sm:$0xff]
    %v1436 = vld [vmem:[#allocation10 + $0x630] sm:$0xff]
    %v1437 = vld [vmem:[#allocation10 + $0x638] sm:$0xff]
    %v1438 = vld [vmem:[#allocation10 + $0x640] sm:$0xff]
    %v1439 = vld [vmem:[#allocation10 + $0x648] sm:$0xff]
    %v1440 = vld [vmem:[#allocation10 + $0x650] sm:$0xff]
    %v1441 = vld [vmem:[#allocation10 + $0x658] sm:$0xff]
    %v1442 = vld [vmem:[#allocation10 + $0x660] sm:$0xff]
    %v1443 = vld [vmem:[#allocation10 + $0x668] sm:$0xff]
    %v1444 = vld [vmem:[#allocation10 + $0x670] sm:$0xff]
    %v1445 = vld [vmem:[#allocation10 + $0x678] sm:$0xff]
    %v1446 = vld [vmem:[#allocation10 + $0x680] sm:$0xff]
    %v1447 = vld [vmem:[#allocation10 + $0x688] sm:$0xff]
    %v1448 = vld [vmem:[#allocation10 + $0x690] sm:$0xff]
    %v1449 = vld [vmem:[#allocation10 + $0x698] sm:$0xff]
    %v1450 = vld [vmem:[#allocation10 + $0x6a0] sm:$0xff]
    %v1451 = vld [vmem:[#allocation10 + $0x6a8] sm:$0xff]
    %v1452 = vld [vmem:[#allocation10 + $0x6b0] sm:$0xff]
    %v1453 = vld [vmem:[#allocation10 + $0x6b8] sm:$0xff]
    %v1454 = vld [vmem:[#allocation10 + $0x6c0] sm:$0xff]
    %v1455 = vld [vmem:[#allocation10 + $0x6c8] sm:$0xff]
    %v1456 = vld [vmem:[#allocation10 + $0x6d0] sm:$0xff]
    %v1457 = vld [vmem:[#allocation10 + $0x6d8] sm:$0xff]
    %v1458 = vld [vmem:[#allocation10 + $0x6e0] sm:$0xff]
    %v1459 = vld [vmem:[#allocation10 + $0x6e8] sm:$0xff]
    %v1460 = vld [vmem:[#allocation10 + $0x6f0] sm:$0xff]
    %v1461 = vld [vmem:[#allocation10 + $0x6f8] sm:$0xff]
    %v1462 = vld [vmem:[#allocation10 + $0x700] sm:$0xff]
    %v1463 = vld [vmem:[#allocation10 + $0x708] sm:$0xff]
    %v1464 = vld [vmem:[#allocation10 + $0x710] sm:$0xff]
    %v1465 = vld [vmem:[#allocation10 + $0x718] sm:$0xff]
    %v1466 = vld [vmem:[#allocation10 + $0x720] sm:$0xff]
    %v1467 = vld [vmem:[#allocation10 + $0x728] sm:$0xff]
    %v1468 = vld [vmem:[#allocation10 + $0x730] sm:$0xff]
    %v1469 = vld [vmem:[#allocation10 + $0x738] sm:$0xff]
    %v1470 = vld [vmem:[#allocation10 + $0x740] sm:$0xff]
    %v1471 = vld [vmem:[#allocation10 + $0x748] sm:$0xff]
    %v1472 = vld [vmem:[#allocation10 + $0x750] sm:$0xff]
    %v1473 = vld [vmem:[#allocation10 + $0x758] sm:$0xff]
    %v1474 = vld [vmem:[#allocation10 + $0x760] sm:$0xff]
    %v1475 = vld [vmem:[#allocation10 + $0x768] sm:$0xff]
    %v1476 = vld [vmem:[#allocation10 + $0x770] sm:$0xff]
    %v1477 = vld [vmem:[#allocation10 + $0x778] sm:$0xff]
    %v1478 = vld [vmem:[#allocation10 + $0x780] sm:$0xff]
    %v1479 = vld [vmem:[#allocation10 + $0x788] sm:$0xff]
    %v1480 = vld [vmem:[#allocation10 + $0x790] sm:$0xff]
    %v1481 = vld [vmem:[#allocation10 + $0x798] sm:$0xff]
    %v1482 = vld [vmem:[#allocation10 + $0x7a0] sm:$0xff]
    %v1483 = vld [vmem:[#allocation10 + $0x7a8] sm:$0xff]
    %v1484 = vld [vmem:[#allocation10 + $0x7b0] sm:$0xff]
    %v1485 = vld [vmem:[#allocation10 + $0x7b8] sm:$0xff]
    %v1486 = vld [vmem:[#allocation10 + $0x7c0] sm:$0xff]
    %v1487 = vld [vmem:[#allocation10 + $0x7c8] sm:$0xff]
    %v1488 = vld [vmem:[#allocation10 + $0x7d0] sm:$0xff]
    %v1489 = vld [vmem:[#allocation10 + $0x7d8] sm:$0xff]
    %v1490 = vld [vmem:[#allocation10 + $0x7e0] sm:$0xff]
    %v1491 = vld [vmem:[#allocation10 + $0x7e8] sm:$0xff]
    %v1492 = vld [vmem:[#allocation10 + $0x7f0] sm:$0xff]
    %v1493 = vld [vmem:[#allocation10 + $0x7f8] sm:$0xff]
    %v1494 = vld [vmem:[%s7] sm:$0xf]
    %v1496 = vlaneseq
    %v1497 = vshrl.u32 %v1496, 7
    %v1498 = vsub.s32 0, %v1497
    %v1499 = vrot.slane %v1494, %v1498
    %v1500 = vlaneseq
    %v1501 = vshrl.u32 %v1500, 7
    %v1502 = vsub.s32 1, %v1501
    %v1503 = vrot.slane %v1494, %v1502
    %v1504 = vlaneseq
    %v1505 = vshrl.u32 %v1504, 7
    %v1506 = vsub.s32 2, %v1505
    %v1507 = vrot.slane %v1494, %v1506
    %v1508 = vlaneseq
    %v1509 = vshrl.u32 %v1508, 7
    %v1510 = vsub.s32 3, %v1509
    %v1511 = vrot.slane %v1494, %v1510
    %1516 = vmatprep.subr.mxu0 %v1239
    %1517 = vmatpush1.msra.mxu0 %v1238
    %1518 = vmatprep.subr.mxu0 %v1243
    %1519 = vmatpush1.msra.mxu0 %v1242
    %1520 = vmatprep.subr.mxu0 %v1247
    %1521 = vmatpush1.msra.mxu0 %v1246
    %1522 = vmatprep.subr.mxu0 %v1251
    %1523 = vmatpush1.msra.mxu0 %v1250
    %1524 = vmatprep.subr.mxu0 %v1255
    %1525 = vmatpush1.msra.mxu0 %v1254
    %1526 = vmatprep.subr.mxu0 %v1259
    %1527 = vmatpush1.msra.mxu0 %v1258
    %1528 = vmatprep.subr.mxu0 %v1263
    %1529 = vmatpush1.msra.mxu0 %v1262
    %1530 = vmatprep.subr.mxu0 %v1267
    %1531 = vmatpush1.msra.mxu0 %v1266
    %1532 = vmatprep.subr.mxu0 %v1271
    %1533 = vmatpush1.msra.mxu0 %v1270
    %1534 = vmatprep.subr.mxu0 %v1275
    %1535 = vmatpush1.msra.mxu0 %v1274
    %1536 = vmatprep.subr.mxu0 %v1279
    %1537 = vmatpush1.msra.mxu0 %v1278
    %1538 = vmatprep.subr.mxu0 %v1283
    %1539 = vmatpush1.msra.mxu0 %v1282
    %1540 = vmatprep.subr.mxu0 %v1287
    %1541 = vmatpush1.msra.mxu0 %v1286
    %1542 = vmatprep.subr.mxu0 %v1291
    %1543 = vmatpush1.msra.mxu0 %v1290
    %1544 = vmatprep.subr.mxu0 %v1295
    %1545 = vmatpush1.msra.mxu0 %v1294
    %1546 = vmatprep.subr.mxu0 %v1299
    %1547 = vmatpush1.msra.mxu0 %v1298
    %1548 = vmatprep.subr.mxu0 %v1303
    %1549 = vmatpush1.msra.mxu0 %v1302
    %1550 = vmatprep.subr.mxu0 %v1307
    %1551 = vmatpush1.msra.mxu0 %v1306
    %1552 = vmatprep.subr.mxu0 %v1311
    %1553 = vmatpush1.msra.mxu0 %v1310
    %1554 = vmatprep.subr.mxu0 %v1315
    %1555 = vmatpush1.msra.mxu0 %v1314
    %1556 = vmatprep.subr.mxu0 %v1319
    %1557 = vmatpush1.msra.mxu0 %v1318
    %1558 = vmatprep.subr.mxu0 %v1323
    %1559 = vmatpush1.msra.mxu0 %v1322
    %1560 = vmatprep.subr.mxu0 %v1327
    %1561 = vmatpush1.msra.mxu0 %v1326
    %1562 = vmatprep.subr.mxu0 %v1331
    %1563 = vmatpush1.msra.mxu0 %v1330
    %1564 = vmatprep.subr.mxu0 %v1335
    %1565 = vmatpush1.msra.mxu0 %v1334
    %1566 = vmatprep.subr.mxu0 %v1339
    %1567 = vmatpush1.msra.mxu0 %v1338
    %1568 = vmatprep.subr.mxu0 %v1343
    %1569 = vmatpush1.msra.mxu0 %v1342
    %1570 = vmatprep.subr.mxu0 %v1347
    %1571 = vmatpush1.msra.mxu0 %v1346
    %1572 = vmatprep.subr.mxu0 %v1351
    %1573 = vmatpush1.msra.mxu0 %v1350
    %1574 = vmatprep.subr.mxu0 %v1355
    %1575 = vmatpush1.msra.mxu0 %v1354
    %1576 = vmatprep.subr.mxu0 %v1359
    %1577 = vmatpush1.msra.mxu0 %v1358
    %1578 = vmatprep.subr.mxu0 %v1363
    %1579 = vmatpush1.msra.mxu0 %v1362
    %1580 = vmatprep.mubr.f32.mxu0 %v1235
    %1581 = vmatmul.mubr.f32.gmra.mrb[0].mxu0 %v1234
    %v1582 = vpop.f32.mrb[0].mxu0
    %v1583 = vadd.f32 %v1499, %v1582
    %v1584 = vpop.f32.mrb[0].mxu0
    %v1585 = vadd.f32 %v1503, %v1584
    %1586 = vdwg.mxu0
    %1587 = vmatprep.subr.mxu0 %v1367
    %1588 = vmatpush1.msra.mxu0 %v1366
    %1589 = vmatprep.subr.mxu0 %v1371
    %1590 = vmatpush1.msra.mxu0 %v1370
    %1591 = vmatprep.subr.mxu0 %v1375
    %1592 = vmatpush1.msra.mxu0 %v1374
    %1593 = vmatprep.subr.mxu0 %v1379
    %1594 = vmatpush1.msra.mxu0 %v1378
    %1595 = vmatprep.subr.mxu0 %v1383
    %1596 = vmatpush1.msra.mxu0 %v1382
    %1597 = vmatprep.subr.mxu0 %v1387
    %1598 = vmatpush1.msra.mxu0 %v1386
    %1599 = vmatprep.subr.mxu0 %v1391
    %1600 = vmatpush1.msra.mxu0 %v1390
    %1601 = vmatprep.subr.mxu0 %v1395
    %1602 = vmatpush1.msra.mxu0 %v1394
    %1603 = vmatprep.subr.mxu0 %v1399
    %1604 = vmatpush1.msra.mxu0 %v1398
    %1605 = vmatprep.subr.mxu0 %v1403
    %1606 = vmatpush1.msra.mxu0 %v1402
    %1607 = vmatprep.subr.mxu0 %v1407
    %1608 = vmatpush1.msra.mxu0 %v1406
    %1609 = vmatprep.subr.mxu0 %v1411
    %1610 = vmatpush1.msra.mxu0 %v1410
    %1611 = vmatprep.subr.mxu0 %v1415
    %1612 = vmatpush1.msra.mxu0 %v1414
    %1613 = vmatprep.subr.mxu0 %v1419
    %1614 = vmatpush1.msra.mxu0 %v1418
    %1615 = vmatprep.subr.mxu0 %v1423
    %1616 = vmatpush1.msra.mxu0 %v1422
    %1617 = vmatprep.subr.mxu0 %v1427
    %1618 = vmatpush1.msra.mxu0 %v1426
    %1619 = vmatprep.subr.mxu0 %v1431
    %1620 = vmatpush1.msra.mxu0 %v1430
    %1621 = vmatprep.subr.mxu0 %v1435
    %1622 = vmatpush1.msra.mxu0 %v1434
    %1623 = vmatprep.subr.mxu0 %v1439
    %1624 = vmatpush1.msra.mxu0 %v1438
    %1625 = vmatprep.subr.mxu0 %v1443
    %1626 = vmatpush1.msra.mxu0 %v1442
    %1627 = vmatprep.subr.mxu0 %v1447
    %1628 = vmatpush1.msra.mxu0 %v1446
    %1629 = vmatprep.subr.mxu0 %v1451
    %1630 = vmatpush1.msra.mxu0 %v1450
    %1631 = vmatprep.subr.mxu0 %v1455
    %1632 = vmatpush1.msra.mxu0 %v1454
    %1633 = vmatprep.subr.mxu0 %v1459
    %1634 = vmatpush1.msra.mxu0 %v1458
    %1635 = vmatprep.subr.mxu0 %v1463
    %1636 = vmatpush1.msra.mxu0 %v1462
    %1637 = vmatprep.subr.mxu0 %v1467
    %1638 = vmatpush1.msra.mxu0 %v1466
    %1639 = vmatprep.subr.mxu0 %v1471
    %1640 = vmatpush1.msra.mxu0 %v1470
    %1641 = vmatprep.subr.mxu0 %v1475
    %1642 = vmatpush1.msra.mxu0 %v1474
    %1643 = vmatprep.subr.mxu0 %v1479
    %1644 = vmatpush1.msra.mxu0 %v1478
    %1645 = vmatprep.subr.mxu0 %v1483
    %1646 = vmatpush1.msra.mxu0 %v1482
    %1647 = vmatprep.subr.mxu0 %v1487
    %1648 = vmatpush1.msra.mxu0 %v1486
    %1649 = vmatprep.subr.mxu0 %v1491
    %1650 = vmatpush1.msra.mxu0 %v1490
    %1651 = vmatprep.mubr.f32.mxu0 %v1237
    %1652 = vmatmul.mubr.f32.gmra.mrb[0].mxu0 %v1236
    %v1653 = vpop.f32.mrb[0].mxu0
    %v1654 = vadd.f32 %v1583, %v1653
    %v1655 = vpop.f32.mrb[0].mxu0
    %v1656 = vadd.f32 %v1585, %v1655
    %1657 = vdwg.mxu0
    %1658 = vmatprep.subr.mxu0 %v1241
    %1659 = vmatpush1.msra.mxu0 %v1240
    %1660 = vmatprep.subr.mxu0 %v1245
    %1661 = vmatpush1.msra.mxu0 %v1244
    %1662 = vmatprep.subr.mxu0 %v1249
    %1663 = vmatpush1.msra.mxu0 %v1248
    %1664 = vmatprep.subr.mxu0 %v1253
    %1665 = vmatpush1.msra.mxu0 %v1252
    %1666 = vmatprep.subr.mxu0 %v1257
    %1667 = vmatpush1.msra.mxu0 %v1256
    %1668 = vmatprep.subr.mxu0 %v1261
    %1669 = vmatpush1.msra.mxu0 %v1260
    %1670 = vmatprep.subr.mxu0 %v1265
    %1671 = vmatpush1.msra.mxu0 %v1264
    %1672 = vmatprep.subr.mxu0 %v1269
    %1673 = vmatpush1.msra.mxu0 %v1268
    %1674 = vmatprep.subr.mxu0 %v1273
    %1675 = vmatpush1.msra.mxu0 %v1272
    %1676 = vmatprep.subr.mxu0 %v1277
    %1677 = vmatpush1.msra.mxu0 %v1276
    %1678 = vmatprep.subr.mxu0 %v1281
    %1679 = vmatpush1.msra.mxu0 %v1280
    %1680 = vmatprep.subr.mxu0 %v1285
    %1681 = vmatpush1.msra.mxu0 %v1284
    %1682 = vmatprep.subr.mxu0 %v1289
    %1683 = vmatpush1.msra.mxu0 %v1288
    %1684 = vmatprep.subr.mxu0 %v1293
    %1685 = vmatpush1.msra.mxu0 %v1292
    %1686 = vmatprep.subr.mxu0 %v1297
    %1687 = vmatpush1.msra.mxu0 %v1296
    %1688 = vmatprep.subr.mxu0 %v1301
    %1689 = vmatpush1.msra.mxu0 %v1300
    %1690 = vmatprep.subr.mxu0 %v1305
    %1691 = vmatpush1.msra.mxu0 %v1304
    %1692 = vmatprep.subr.mxu0 %v1309
    %1693 = vmatpush1.msra.mxu0 %v1308
    %1694 = vmatprep.subr.mxu0 %v1313
    %1695 = vmatpush1.msra.mxu0 %v1312
    %1696 = vmatprep.subr.mxu0 %v1317
    %1697 = vmatpush1.msra.mxu0 %v1316
    %1698 = vmatprep.subr.mxu0 %v1321
    %1699 = vmatpush1.msra.mxu0 %v1320
    %1700 = vmatprep.subr.mxu0 %v1325
    %1701 = vmatpush1.msra.mxu0 %v1324
    %1702 = vmatprep.subr.mxu0 %v1329
    %1703 = vmatpush1.msra.mxu0 %v1328
    %1704 = vmatprep.subr.mxu0 %v1333
    %1705 = vmatpush1.msra.mxu0 %v1332
    %1706 = vmatprep.subr.mxu0 %v1337
    %1707 = vmatpush1.msra.mxu0 %v1336
    %1708 = vmatprep.subr.mxu0 %v1341
    %1709 = vmatpush1.msra.mxu0 %v1340
    %1710 = vmatprep.subr.mxu0 %v1345
    %1711 = vmatpush1.msra.mxu0 %v1344
    %1712 = vmatprep.subr.mxu0 %v1349
    %1713 = vmatpush1.msra.mxu0 %v1348
    %1714 = vmatprep.subr.mxu0 %v1353
    %1715 = vmatpush1.msra.mxu0 %v1352
    %1716 = vmatprep.subr.mxu0 %v1357
    %1717 = vmatpush1.msra.mxu0 %v1356
    %1718 = vmatprep.subr.mxu0 %v1361
    %1719 = vmatpush1.msra.mxu0 %v1360
    %1720 = vmatprep.subr.mxu0 %v1365
    %1721 = vmatpush1.msra.mxu0 %v1364
    %1722 = vmatprep.mubr.f32.mxu0 %v1235
    %1723 = vmatmul.mubr.f32.gmra.mrb[0].mxu0 %v1234
    %v1724 = vpop.f32.mrb[0].mxu0
    %v1725 = vadd.f32 %v1507, %v1724
    %v1726 = vpop.f32.mrb[0].mxu0
    %v1727 = vadd.f32 %v1511, %v1726
    %1728 = vdwg.mxu0
    %1729 = vmatprep.subr.mxu0 %v1369
    %1730 = vmatpush1.msra.mxu0 %v1368
    %1731 = vmatprep.subr.mxu0 %v1373
    %1732 = vmatpush1.msra.mxu0 %v1372
    %1733 = vmatprep.subr.mxu0 %v1377
    %1734 = vmatpush1.msra.mxu0 %v1376
    %1735 = vmatprep.subr.mxu0 %v1381
    %1736 = vmatpush1.msra.mxu0 %v1380
    %1737 = vmatprep.subr.mxu0 %v1385
    %1738 = vmatpush1.msra.mxu0 %v1384
    %1739 = vmatprep.subr.mxu0 %v1389
    %1740 = vmatpush1.msra.mxu0 %v1388
    %1741 = vmatprep.subr.mxu0 %v1393
    %1742 = vmatpush1.msra.mxu0 %v1392
    %1743 = vmatprep.subr.mxu0 %v1397
    %1744 = vmatpush1.msra.mxu0 %v1396
    %1745 = vmatprep.subr.mxu0 %v1401
    %1746 = vmatpush1.msra.mxu0 %v1400
    %1747 = vmatprep.subr.mxu0 %v1405
    %1748 = vmatpush1.msra.mxu0 %v1404
    %1749 = vmatprep.subr.mxu0 %v1409
    %1750 = vmatpush1.msra.mxu0 %v1408
    %1751 = vmatprep.subr.mxu0 %v1413
    %1752 = vmatpush1.msra.mxu0 %v1412
    %1753 = vmatprep.subr.mxu0 %v1417
    %1754 = vmatpush1.msra.mxu0 %v1416
    %1755 = vmatprep.subr.mxu0 %v1421
    %1756 = vmatpush1.msra.mxu0 %v1420
    %1757 = vmatprep.subr.mxu0 %v1425
    %1758 = vmatpush1.msra.mxu0 %v1424
    %1759 = vmatprep.subr.mxu0 %v1429
    %1760 = vmatpush1.msra.mxu0 %v1428
    %1761 = vmatprep.subr.mxu0 %v1433
    %1762 = vmatpush1.msra.mxu0 %v1432
    %1763 = vmatprep.subr.mxu0 %v1437
    %1764 = vmatpush1.msra.mxu0 %v1436
    %1765 = vmatprep.subr.mxu0 %v1441
    %1766 = vmatpush1.msra.mxu0 %v1440
    %1767 = vmatprep.subr.mxu0 %v1445
    %1768 = vmatpush1.msra.mxu0 %v1444
    %1769 = vmatprep.subr.mxu0 %v1449
    %1770 = vmatpush1.msra.mxu0 %v1448
    %1771 = vmatprep.subr.mxu0 %v1453
    %1772 = vmatpush1.msra.mxu0 %v1452
    %1773 = vmatprep.subr.mxu0 %v1457
    %1774 = vmatpush1.msra.mxu0 %v1456
    %1775 = vmatprep.subr.mxu0 %v1461
    %1776 = vmatpush1.msra.mxu0 %v1460
    %1777 = vmatprep.subr.mxu0 %v1465
    %1778 = vmatpush1.msra.mxu0 %v1464
    %1779 = vmatprep.subr.mxu0 %v1469
    %1780 = vmatpush1.msra.mxu0 %v1468
    %1781 = vmatprep.subr.mxu0 %v1473
    %1782 = vmatpush1.msra.mxu0 %v1472
    %1783 = vmatprep.subr.mxu0 %v1477
    %1784 = vmatpush1.msra.mxu0 %v1476
    %1785 = vmatprep.subr.mxu0 %v1481
    %1786 = vmatpush1.msra.mxu0 %v1480
    %1787 = vmatprep.subr.mxu0 %v1485
    %1788 = vmatpush1.msra.mxu0 %v1484
    %1789 = vmatprep.subr.mxu0 %v1489
    %1790 = vmatpush1.msra.mxu0 %v1488
    %1791 = vmatprep.subr.mxu0 %v1493
    %1792 = vmatpush1.msra.mxu0 %v1492
    %1793 = vmatprep.mubr.f32.mxu0 %v1237
    %1794 = vmatmul.mubr.f32.gmra.mrb[0].mxu0 %v1236
    %v1795 = vpop.f32.mrb[0].mxu0
    %v1796 = vadd.f32 %v1725, %v1795
    %v1797 = vpop.f32.mrb[0].mxu0
    %v1798 = vadd.f32 %v1727, %v1797
    %1799 = vdwg.mxu0
    %v1800 = vmax.f32 %v1654, %v1656
    %v1801 = vmax.f32 %v1796, %v1798
    %v1802 = vmax.f32 %v1800, %v1801
    %1803 = vmax.xlane.f32.xlu0 %v1802
    %v1804 = vpop.xlane.xlu0 %1803
    %v1805 = vsub.f32 %v1654, %v1804
    %v1806 = vsub.f32 %v1656, %v1804
    %v1807 = vsub.f32 %v1796, %v1804
    %v1808 = vsub.f32 %v1798, %v1804
    %v1809 = vmul.f32 %v1805, 1.442695
    %v1810 = vpow.pop %v1809
    %v1811 = vmul.f32 %v1806, 1.442695
    %v1812 = vpow.pop %v1811
    %v1813 = vmul.f32 %v1807, 1.442695
    %v1814 = vpow.pop %v1813
    %v1815 = vmul.f32 %v1808, 1.442695
    %v1816 = vpow.pop %v1815
    %v1817 = vadd.f32 %v1810, %v1812
    %v1818 = vadd.f32 %v1817, %v1814
    %v1819 = vadd.f32 %v1818, %v1816
    %1820 = vadd.xlane.f32.xlu0 %v1819
    %v1821 = vpop.xlane.xlu0 %1820
    %v1822 = vrcp.pop %v1821
    %v1823 = vmul.f32 %v1810, %v1822
    %v1824 = vmul.f32 %v1812, %v1822
    %v1825 = vmul.f32 %v1814, %v1822
    %v1826 = vmul.f32 %v1816, %v1822
    %v1827 = vadd.f32 %v1823, 1.0
    %v1828 = vadd.f32 %v1824, 1.0
    %v1829 = vadd.f32 %v1825, 1.0
    %v1830 = vadd.f32 %v1826, 1.0
    %v1831 = vmul.f32 %v94, %v1827
    %v1832 = vmul.f32 %v95, %v1828
    %v1833 = vmul.f32 %v96, %v1829
    %v1834 = vmul.f32 %v97, %v1830
    %1835 = vst [vmem:[#allocation11] sm:$0xff] %v1831
    %1836 = vst [vmem:[#allocation11 + $0x8] sm:$0xff] %v1832
    %1837 = vst [vmem:[#allocation11 + $0x10] sm:$0xff] %v1833
    %1838 = vst [vmem:[#allocation11 + $0x18] sm:$0xff] %v1834
    // Predicated region
    $region54: #{tpu_custom_call.1} parent=1 // pred_check
      _
    $region55: #{tpu_custom_call.1} parent=1 // pred_check_branch
      %1840 = sbr.rel (0) target = $region57
    $region56: #{tpu_custom_call.1} parent=1 // pred_region
      %s1842 = ssub.s32 512, 512
      %1843 = vsyncadd [#allocation4], %s1842
      %s1845 = sshll.u32 [#allocation11], 4
      %s1846 = int_to_ptr.vmem [resolvable:$true] %s1845
      %1848 = dma.vmem_to_hbm [thread:$0]  %s1846, 512, %s8, [#allocation4]
    $region57: #{tpu_custom_call.1} parent=1 // pred_fallthru
      _
    // Predicated region
    $region58: #{tpu_custom_call.1} parent=1 // pred_check
      _
    $region59: #{tpu_custom_call.1} parent=1 // pred_check_branch
      %1850 = sbr.rel (0) target = $region61
    $region60: #{tpu_custom_call.1} parent=1 // pred_region
      %1851 = dma.done [#allocation4], 512
    $region61: #{tpu_custom_call.1} parent=1 // pred_fallthru
      _
    %1852 = vsyncpa [#allocation3], 1
    %1853 = vsyncpa [#allocation6], 1
    %1854 = vsyncpa [#allocation9], 1
    %1855 = vsyncpa [#allocation4], 1

</llo_original>
